<compile_context>
chip_gen: v7x
topology: tpu7x:2x2x1
jax: 0.10.0
libtpu: 0.0.40
codegen_flags: <defaults>
</compile_context>

<pallas_src>
import functools

import jax
import jax.numpy as jnp
from jax.experimental import pallas as pl
from jax.experimental.pallas import tpu as pltpu


def _round_up(x, m):
    return ((x + m - 1) // m) * m


def _finetune_kernel(x_ref, w1_ref, bw_ref, b2_ref, o_ref, acc_ref, *, bk, resident):
    """Grid = (batch_tiles, k_tiles); k (reduction over D_in) is innermost."""
    k = pl.program_id(1)

    @pl.when(k == 0)
    def _init():
        acc_ref[...] = jnp.zeros_like(acc_ref)

    # Activations arrive in natural (tb, bk) f32 layout; cast to bf16 on the VPU
    # so the MXU sees bf16 x bf16 with an f32 accumulator.
    x_blk = x_ref[...].astype(jnp.bfloat16)                       # (tb, bk)
    if resident:
        # Weight is the full (Kp, F) VMEM-resident block; take this K-slice.
        w_blk = w1_ref[pl.ds(pl.multiple_of(k * bk, bk), bk), :]  # (bk, F)
    else:
        w_blk = w1_ref[...]                                       # streamed (bk, F)
    acc_ref[...] += jnp.dot(x_blk, w_blk, preferred_element_type=jnp.float32)

    @pl.when(k == pl.num_programs(1) - 1)
    def _finalize():
        # Encoder epilogue: bias + ReLU.  Features ride the lane axis, batch the
        # sublane axis, so b_enc is a (1, F) row broadcast across sublanes.
        h = jnp.maximum(acc_ref[...] + bw_ref[0:1, :], 0.0)       # (tb, F) f32
        # Classifier Linear(F -> 1): VPU multiply + XLU cross-lane reduction,
        # avoiding an N=1 MXU matmul.  Classifier bias is an SMEM scalar.
        logits = jnp.sum(h * bw_ref[1:2, :], axis=1, keepdims=True) + b2_ref[0, 0]
        # Exact sigmoid (epilogue is a tiny (tb, 1) tile; keeps output in [0, 1]).
        o_ref[...] = (1.0 / (1.0 + jnp.exp(-logits))).astype(o_ref.dtype)


@functools.partial(jax.jit, static_argnames=("block_k", "block_b"))
def finetune_forward(x_nchw, w_enc_kf, b_enc, w_cls, b_cls, *,
                     block_k=2048, block_b=256):
    """x_nchw: (B, C, H, W) float32. Returns (B, 1) float32 probabilities."""
    B = x_nchw.shape[0]
    x_flat = x_nchw.reshape(B, -1)          # row-major flatten, matches torch .view
    D_in = x_flat.shape[1]
    F = w_enc_kf.shape[1]

    bb = min(block_b, _round_up(B, 8))      # don't over-pad tiny batches
    Bp = _round_up(B, bb)
    bk = min(block_k, _round_up(D_in, 128))
    Kp = _round_up(D_in, bk)

    # Glue (plain JAX): zero-pad only (no transpose, no dtype pass over x).
    x_p = jnp.pad(x_flat, ((0, Bp - B), (0, Kp - D_in)))                 # (Bp, Kp) f32
    w1 = jnp.pad(w_enc_kf.astype(jnp.bfloat16), ((0, Kp - D_in), (0, 0)))  # (Kp, F)
    bw = jnp.stack([b_enc.astype(jnp.float32),
                    w_cls.astype(jnp.float32)])                          # (2, F)
    b2 = b_cls.reshape(1, 1).astype(jnp.float32)

    # Weight residency: keep the whole encoder weight in VMEM when it fits the
    # budget (cap ~8 MiB so even double-buffered it stays well inside v7x's
    # 32 MiB scoped default alongside the x pipeline + accumulator).
    resident = (Kp * F * 2) <= (8 << 20)
    if resident:
        w1_spec = pl.BlockSpec((Kp, F), lambda j, k: (0, 0))   # fetched once, reused
    else:
        # TODO(synk): streamed fallback re-fetches weight blocks per batch tile;
        # for very large encoders add a two-level pipeline instead.
        w1_spec = pl.BlockSpec((bk, F), lambda j, k: (k, 0))

    grid = (Bp // bb, Kp // bk)
    kernel = functools.partial(_finetune_kernel, bk=bk, resident=resident)

    out = pl.pallas_call(
        kernel,
        out_shape=jax.ShapeDtypeStruct((Bp, 1), jnp.float32),
        grid=grid,
        in_specs=[
            pl.BlockSpec((bb, bk), lambda j, k: (j, k)),            # x (f32, natural)
            w1_spec,                                                # encoder weight (bf16)
            pl.BlockSpec((2, F), lambda j, k: (0, 0)),              # [b_enc; w_cls]
            pl.BlockSpec(memory_space=pltpu.MemorySpace.SMEM),      # b_cls scalar
        ],
        out_specs=pl.BlockSpec((bb, 1), lambda j, k: (j, 0)),
        scratch_shapes=[pltpu.VMEM((bb, F), jnp.float32)],          # f32 accumulator
        compiler_params=pltpu.CompilerParams(
            dimension_semantics=("parallel", "arbitrary")),
    )(x_p, w1, bw, b2)

    return out[:B]


def make_params(key, d_in, feature_dim=512):
    """Deterministic synthetic parameters (no checkpoint load).

    Encoder weight is stored once in bf16 and in (in_features, out_features)
    layout so the kernel needs neither a per-call cast nor any transpose.
    """
    k1, k2, k3, k4 = jax.random.split(key, 4)
    w_enc_kf = (jax.random.normal(k1, (d_in, feature_dim), jnp.float32)
                * (1.0 / jnp.sqrt(d_in))).astype(jnp.bfloat16)
    b_enc = jax.random.normal(k2, (feature_dim,), jnp.float32) * 0.01
    w_cls = (jax.random.normal(k3, (feature_dim,), jnp.float32)
             * (1.0 / jnp.sqrt(feature_dim)))
    b_cls = jax.random.normal(k4, (1,), jnp.float32) * 0.01
    return w_enc_kf, b_enc, w_cls, b_cls


if __name__ == "__main__":
    key = jax.random.PRNGKey(0)
    kx, kp = jax.random.split(key)

    B, C, H, W = 2, 4, 16, 16            # small NCHW input
    feature_dim = 512
    x = jax.random.normal(kx, (B, C, H, W), jnp.float32)

    w_enc_kf, b_enc, w_cls, b_cls = make_params(kp, C * H * W, feature_dim)

    out = finetune_forward(x, w_enc_kf, b_enc, w_cls, b_cls)
    out = jax.block_until_ready(out)

    # Reference in plain JAX (same bf16 rounding of the encoder matmul inputs
    # as the kernel; accumulation is f32 in both).
    x_flat = x.reshape(B, -1)
    x_bf = x_flat.astype(jnp.bfloat16).astype(jnp.float32)
    h_ref = jnp.maximum(x_bf @ w_enc_kf.astype(jnp.float32) + b_enc, 0.0)
    ref = jax.nn.sigmoid(h_ref @ w_cls.reshape(-1, 1) + b_cls.reshape(1, 1))

    assert out.shape == (B, 1)
    assert jnp.allclose(out, ref, atol=2e-2), (out, ref)

    print("KERNEL_OK")
</pallas_src>

<mosaic_0001>
module attributes {stable_mosaic.version = 11 : i64} {
  func.func @_finetune_kernel(%arg0: i32, %arg1: i32, %arg2: memref<8x1024xf32, #tpu.memory_space<vmem>>, %arg3: memref<1024x512xbf16, #tpu.memory_space<vmem>>, %arg4: memref<2x512xf32, #tpu.memory_space<vmem>>, %arg5: memref<1x1xf32, #tpu.memory_space<smem>>, %arg6: memref<8x1xf32, #tpu.memory_space<vmem>>, %arg7: memref<8x512xf32, #tpu.memory_space<vmem>>) attributes {dimension_semantics = [#tpu.dimension_semantics<parallel>, #tpu.dimension_semantics<arbitrary>], iteration_bounds = array<i64: 1, 1>, scalar_prefetch = 0 : i64, scratch_operands = 1 : i64, tpu.core_type = #tpu.core_type<tc>, window_params = [{transform_indices = @transform_0, window_bounds = array<i64: 8, 1024>}, {pipeline_mode = #tpu.pipeline_mode<synchronous>, transform_indices = @transform_1, window_bounds = array<i64: 1024, 512>}, {pipeline_mode = #tpu.pipeline_mode<synchronous>, transform_indices = @transform_2, window_bounds = array<i64: 2, 512>}, {transform_indices = @transform_3, window_bounds = array<i64: 1, 1>}, {transform_indices = @transform_4, window_bounds = array<i64: 8, 1>}]} {
    %c0_i32 = arith.constant 0 : i32
    %0 = arith.cmpi eq, %arg1, %c0_i32 : i32
    %1 = arith.extui %0 : i1 to i32
    %c0_i32_0 = arith.constant 0 : i32
    %2 = arith.cmpi ne, %1, %c0_i32_0 : i32
    scf.if %2 {
      %cst_9 = arith.constant 0.000000e+00 : f32
      %16 = vector.broadcast %cst_9 : f32 to vector<8x512xf32>
      %c0_10 = arith.constant 0 : index
      %c0_11 = arith.constant 0 : index
      %17 = vector.load %arg7[%c0_10, %c0_11] : memref<8x512xf32, #tpu.memory_space<vmem>>, vector<8x512xf32>
      tpu.vector_store %arg7[%c0_10, %c0_11], %16 {strides = array<i32>} : memref<8x512xf32, #tpu.memory_space<vmem>>, vector<8x512xf32>,
    } else {
    }
    %c0 = arith.constant 0 : index
    %c0_1 = arith.constant 0 : index
    %3 = vector.load %arg2[%c0, %c0_1] : memref<8x1024xf32, #tpu.memory_space<vmem>>, vector<8x1024xf32>
    %4 = arith.truncf %3 : vector<8x1024xf32> to vector<8x1024xbf16>
    %c1024_i32 = arith.constant 1024 : i32
    %5 = arith.muli %arg1, %c1024_i32 : i32
    %6 = tpu.assume_multiple %5, 1024 : i32
    %7 = arith.index_cast %6 : i32 to index
    %c0_2 = arith.constant 0 : index
    %8 = vector.load %arg3[%7, %c0_2] : memref<1024x512xbf16, #tpu.memory_space<vmem>>, vector<1024x512xbf16>
    %c0_3 = arith.constant 0 : index
    %c0_4 = arith.constant 0 : index
    %9 = vector.load %arg7[%c0_3, %c0_4] : memref<8x512xf32, #tpu.memory_space<vmem>>, vector<8x512xf32>
    %cst = arith.constant dense<0.000000e+00> : vector<8x512xf32>
    %10 = tpu.matmul %4, %8, %cst {dimension_numbers = #tpu.dot_dimension_numbers<[1], [0], [0], [1], [0, 0, 1, 1], [], []>} : vector<8x1024xbf16>, vector<1024x512xbf16>, vector<8x512xf32> -> vector<8x512xf32>
    %11 = arith.addf %9, %10 : vector<8x512xf32>
    %c0_5 = arith.constant 0 : index
    %c0_6 = arith.constant 0 : index
    %12 = vector.load %arg7[%c0_5, %c0_6] : memref<8x512xf32, #tpu.memory_space<vmem>>, vector<8x512xf32>
    tpu.vector_store %arg7[%c0_5, %c0_6], %11 {strides = array<i32>} : memref<8x512xf32, #tpu.memory_space<vmem>>, vector<8x512xf32>,
    %c0_i32_7 = arith.constant 0 : i32
    %13 = arith.cmpi eq, %arg1, %c0_i32_7 : i32
    %14 = arith.extui %13 : i1 to i32
    %c0_i32_8 = arith.constant 0 : i32
    %15 = arith.cmpi ne, %14, %c0_i32_8 : i32
    scf.if %15 {
      %c0_9 = arith.constant 0 : index
      %c0_10 = arith.constant 0 : index
      %16 = vector.load %arg7[%c0_9, %c0_10] : memref<8x512xf32, #tpu.memory_space<vmem>>, vector<8x512xf32>
      %c0_11 = arith.constant 0 : index
      %c0_12 = arith.constant 0 : index
      %17 = vector.load %arg4[%c0_11, %c0_12] : memref<2x512xf32, #tpu.memory_space<vmem>>, vector<1x512xf32>
      %18 = vector.broadcast %17 : vector<1x512xf32> to vector<8x512xf32>
      %19 = arith.addf %16, %18 : vector<8x512xf32>
      %cst_13 = arith.constant 0.000000e+00 : f32
      %20 = vector.broadcast %cst_13 : f32 to vector<8x512xf32>
      %21 = arith.maximumf %19, %20 : vector<8x512xf32>
      %c1 = arith.constant 1 : index
      %c0_14 = arith.constant 0 : index
      %22 = vector.load %arg4[%c1, %c0_14] : memref<2x512xf32, #tpu.memory_space<vmem>>, vector<1x512xf32>
      %23 = vector.broadcast %22 : vector<1x512xf32> to vector<8x512xf32>
      %24 = arith.mulf %21, %23 : vector<8x512xf32>
      %cst_15 = arith.constant dense<0.000000e+00> : vector<8xf32>
      %25 = vector.multi_reduction <add>, %24, %cst_15 [1] : vector<8x512xf32> to vector<8xf32>
      %26 = vector.shape_cast %25 : vector<8xf32> to vector<8x1xf32>
      %c0_16 = arith.constant 0 : index
      %c0_17 = arith.constant 0 : index
      %27 = memref.load %arg5[%c0_16, %c0_17] : memref<1x1xf32, #tpu.memory_space<smem>>
      %28 = vector.broadcast %27 : f32 to vector<8x1xf32>
      %29 = arith.addf %26, %28 : vector<8x1xf32>
      %cst_18 = arith.constant 0.000000e+00 : f32
      %30 = vector.broadcast %cst_18 : f32 to vector<8x1xf32>
      %31 = arith.subf %30, %29 : vector<8x1xf32>
      %32 = math.exp %31 : vector<8x1xf32>
      %cst_19 = arith.constant 1.000000e+00 : f32
      %33 = vector.broadcast %cst_19 : f32 to vector<8x1xf32>
      %34 = arith.addf %33, %32 : vector<8x1xf32>
      %cst_20 = arith.constant 1.000000e+00 : f32
      %35 = vector.broadcast %cst_20 : f32 to vector<8x1xf32>
      %36 = arith.divf %35, %34 : vector<8x1xf32>
      %c0_21 = arith.constant 0 : index
      %c0_22 = arith.constant 0 : index
      %37 = vector.load %arg6[%c0_21, %c0_22] : memref<8x1xf32, #tpu.memory_space<vmem>>, vector<8x1xf32>
      tpu.vector_store %arg6[%c0_21, %c0_22], %36 {strides = array<i32>} : memref<8x1xf32, #tpu.memory_space<vmem>>, vector<8x1xf32>,
    } else {
    }
    return
  }
  func.func @transform_0(%arg0: i32, %arg1: i32) -> (i32, i32) {
    %c0_i32 = arith.constant 0 : i32
    return %arg0, %arg1 : i32, i32
  }
  func.func @transform_1(%arg0: i32, %arg1: i32) -> (i32, i32) {
    %c0_i32 = arith.constant 0 : i32
    %c0_i32_0 = arith.constant 0 : i32
    %c0_i32_1 = arith.constant 0 : i32
    return %c0_i32, %c0_i32_0 : i32, i32
  }
  func.func @transform_2(%arg0: i32, %arg1: i32) -> (i32, i32) {
    %c0_i32 = arith.constant 0 : i32
    %c0_i32_0 = arith.constant 0 : i32
    %c0_i32_1 = arith.constant 0 : i32
    return %c0_i32, %c0_i32_0 : i32, i32
  }
  func.func @transform_3(%arg0: i32, %arg1: i32) -> (i32, i32) {
    %c0_i32 = arith.constant 0 : i32
    %c0_i32_0 = arith.constant 0 : i32
    %c0_i32_1 = arith.constant 0 : i32
    return %c0_i32, %c0_i32_0 : i32, i32
  }
  func.func @transform_4(%arg0: i32, %arg1: i32) -> (i32, i32) {
    %c0_i32 = arith.constant 0 : i32
    %c0_i32_0 = arith.constant 0 : i32
    return %arg0, %c0_i32 : i32, i32
  }
}

</mosaic_0001>

<llo_original>
// kernel: finetune_forward.1
$region0: #{finetune_forward.1}
  #allocation0 [shape = 'u32[]', space=smem, size = 0x4, offset = 0x4, fixed_abs, tag = 'smem constant byte address 0x4 - core index']
  #allocation1 [shape = 'u32[144,128]{1,0:T(1,128)}', space=vmem, size = 0x12000, scoped, tag = 'internal scratch']
  #allocation2 [shape = 'f32[8,512]{1,0:T(8,128)}', space=vmem, size = 0x4000, scoped, tag = 'scratch operand']
  #allocation3 [shape = 'f32[1,1]{1,0:T(1,128)S(6)}', space=smem, size = 0x200, scoped, tag = 'scoped memory for finetune_forward.1']
  %s0 = inlined_call_operand.vmem [shape: f32[8,1024], index: 0, kind: input, shape index: {}]
  %s1 = inlined_call_operand.hbm [shape: bf16[1024,512], index: 1, kind: input, shape index: {}]
  %s2 = inlined_call_operand.vmem [shape: f32[2,512], index: 2, kind: input, shape index: {}]
  %s3 = inlined_call_operand.<no memory space> [shape: f32[1,1], index: 3, kind: input, shape index: {}]
  %s4 = inlined_call_operand.vmem [shape: f32[8,1], index: 4, kind: output, shape index: {}]
  %s5 = sld [smem:[#allocation0]]
  $region38: #{finetune_forward.1} parent=0
    _
  %s7 = ssub.s32 1, %s5
  %s8 = scalar_select 0, %s7, %s5
  %9 = sst [smem:[#allocation3]] %s3
  $region1: #{finetune_forward.1} parent=0
    #allocation4 [shape = 'u8[1048576]{0}', space=vmem, size = 0x100000, scoped, tag = 'input window, operand 1, single buffered']
    #allocation5 [shape = 's32[1]{0}', space=sflag, size = 0x4, scoped, tag = 'scoped memory for finetune_forward.1']
    %10 = vsyncpa [#allocation5], 0
    // Predicated region
    $region2: #{finetune_forward.1} parent=1 // pred_check
      _
    $region3: #{finetune_forward.1} parent=1 // pred_check_branch
      %12 = sbr.rel (0) target = $region5
    $region4: #{finetune_forward.1} parent=1 // pred_region
      _
    $region5: #{finetune_forward.1} parent=1 // pred_fallthru
      _
    // Predicated region
    $region6: #{finetune_forward.1} parent=1 // pred_check
      _
    $region7: #{finetune_forward.1} parent=1 // pred_check_branch
      %14 = sbr.rel (0) target = $region9
    $region8: #{finetune_forward.1} parent=1 // pred_region
      %s16 = ssub.s32 32768, 32768
      %17 = vsyncadd [#allocation5], %s16
      %s18 = sshll.u32 [#allocation4], 4
      %s19 = int_to_ptr.vmem [resolvable:$true] %s18
      %24 = dma.hbm_to_vmem [thread:$0]  %s1, 32768, %s19, [#allocation5], 256, 256, 16
    $region9: #{finetune_forward.1} parent=1 // pred_fallthru
      _
    // Predicated region
    $region10: #{finetune_forward.1} parent=1 // pred_check
      _
    $region11: #{finetune_forward.1} parent=1 // pred_check_branch
      %26 = sbr.rel (0) target = $region13
    $region12: #{finetune_forward.1} parent=1 // pred_region
      _
    $region13: #{finetune_forward.1} parent=1 // pred_fallthru
      _
    // Predicated region
    $region14: #{finetune_forward.1} parent=1 // pred_check
      _
    $region15: #{finetune_forward.1} parent=1 // pred_check_branch
      %28 = sbr.rel (0) target = $region17
    $region16: #{finetune_forward.1} parent=1 // pred_region
      _
    $region17: #{finetune_forward.1} parent=1 // pred_fallthru
      _
    // Predicated region
    $region18: #{finetune_forward.1} parent=1 // pred_check
      _
    $region19: #{finetune_forward.1} parent=1 // pred_check_branch
      %30 = sbr.rel (0) target = $region21
    $region20: #{finetune_forward.1} parent=1 // pred_region
      %31 = dma.done [#allocation5], 32768
    $region21: #{finetune_forward.1} parent=1 // pred_fallthru
      _
    %p32 = scmp.eq.s32.totalorder 0, 0
    // Predicated region
    $region22: #{finetune_forward.1} parent=1 // pred_check
      %p33 = pneg %p32
    $region23: #{finetune_forward.1} parent=1 // pred_check_branch
      %35 = sbr.rel (%p33) target = $region25
    $region24: #{finetune_forward.1} parent=1 // pred_region
      %36 = vst [vmem:[#allocation2] sm:$0xff] 0.0
      %37 = vst [vmem:[#allocation2 + $0x8] sm:$0xff] 0.0
      %38 = vst [vmem:[#allocation2 + $0x10] sm:$0xff] 0.0
      %39 = vst [vmem:[#allocation2 + $0x18] sm:$0xff] 0.0
    $region25: #{finetune_forward.1} parent=1 // pred_fallthru
      _
    %v40 = vld [vmem:[%s0] sm:$0xff]
    %v41 = vld [vmem:[%s0 + $0x8] sm:$0xff]
    %v42 = vld [vmem:[%s0 + $0x10] sm:$0xff]
    %v43 = vld [vmem:[%s0 + $0x18] sm:$0xff]
    %v44 = vld [vmem:[%s0 + $0x20] sm:$0xff]
    %v45 = vld [vmem:[%s0 + $0x28] sm:$0xff]
    %v46 = vld [vmem:[%s0 + $0x30] sm:$0xff]
    %v47 = vld [vmem:[%s0 + $0x38] sm:$0xff]
    %v48 = vpack.c.bf16 %v40, %v40
    %v49 = vpack.c.bf16 %v41, %v41
    %v50 = vpack.c.bf16 %v42, %v42
    %v51 = vpack.c.bf16 %v43, %v43
    %v52 = vpack.c.bf16 %v44, %v44
    %v53 = vpack.c.bf16 %v45, %v45
    %v54 = vpack.c.bf16 %v46, %v46
    %v55 = vpack.c.bf16 %v47, %v47
    %s56 = smul.u32 0, 1024
    %s57 = sshra.s32 %s56, 3
    %s58 = sand.u32 %s56, 7
    %s59 = smul.u32 %s57, 4
    %s60 = smul.addr %s59, 4
    %s61 = scalar_lea.vmem [#allocation4], %s60
    %v62 = vld [vmem:[%s61] sm:$0xff]
    %v63 = vld [vmem:[%s61 + $0x8] sm:$0xff]
    %v64 = vld [vmem:[%s61 + $0x10] sm:$0xff]
    %v65 = vld [vmem:[%s61 + $0x18] sm:$0xff]
    %v66 = vld [vmem:[%s61 + $0x20] sm:$0xff]
    %v67 = vld [vmem:[%s61 + $0x28] sm:$0xff]
    %v68 = vld [vmem:[%s61 + $0x30] sm:$0xff]
    %v69 = vld [vmem:[%s61 + $0x38] sm:$0xff]
    %v70 = vld [vmem:[%s61 + $0x40] sm:$0xff]
    %v71 = vld [vmem:[%s61 + $0x48] sm:$0xff]
    %v72 = vld [vmem:[%s61 + $0x50] sm:$0xff]
    %v73 = vld [vmem:[%s61 + $0x58] sm:$0xff]
    %v74 = vld [vmem:[%s61 + $0x60] sm:$0xff]
    %v75 = vld [vmem:[%s61 + $0x68] sm:$0xff]
    %v76 = vld [vmem:[%s61 + $0x70] sm:$0xff]
    %v77 = vld [vmem:[%s61 + $0x78] sm:$0xff]
    %v78 = vld [vmem:[%s61 + $0x80] sm:$0xff]
    %v79 = vld [vmem:[%s61 + $0x88] sm:$0xff]
    %v80 = vld [vmem:[%s61 + $0x90] sm:$0xff]
    %v81 = vld [vmem:[%s61 + $0x98] sm:$0xff]
    %v82 = vld [vmem:[%s61 + $0xa0] sm:$0xff]
    %v83 = vld [vmem:[%s61 + $0xa8] sm:$0xff]
    %v84 = vld [vmem:[%s61 + $0xb0] sm:$0xff]
    %v85 = vld [vmem:[%s61 + $0xb8] sm:$0xff]
    %v86 = vld [vmem:[%s61 + $0xc0] sm:$0xff]
    %v87 = vld [vmem:[%s61 + $0xc8] sm:$0xff]
    %v88 = vld [vmem:[%s61 + $0xd0] sm:$0xff]
    %v89 = vld [vmem:[%s61 + $0xd8] sm:$0xff]
    %v90 = vld [vmem:[%s61 + $0xe0] sm:$0xff]
    %v91 = vld [vmem:[%s61 + $0xe8] sm:$0xff]
    %v92 = vld [vmem:[%s61 + $0xf0] sm:$0xff]
    %v93 = vld [vmem:[%s61 + $0xf8] sm:$0xff]
    %v94 = vld [vmem:[%s61 + $0x100] sm:$0xff]
    %v95 = vld [vmem:[%s61 + $0x108] sm:$0xff]
    %v96 = vld [vmem:[%s61 + $0x110] sm:$0xff]
    %v97 = vld [vmem:[%s61 + $0x118] sm:$0xff]
    %v98 = vld [vmem:[%s61 + $0x120] sm:$0xff]
    %v99 = vld [vmem:[%s61 + $0x128] sm:$0xff]
    %v100 = vld [vmem:[%s61 + $0x130] sm:$0xff]
    %v101 = vld [vmem:[%s61 + $0x138] sm:$0xff]
    %v102 = vld [vmem:[%s61 + $0x140] sm:$0xff]
    %v103 = vld [vmem:[%s61 + $0x148] sm:$0xff]
    %v104 = vld [vmem:[%s61 + $0x150] sm:$0xff]
    %v105 = vld [vmem:[%s61 + $0x158] sm:$0xff]
    %v106 = vld [vmem:[%s61 + $0x160] sm:$0xff]
    %v107 = vld [vmem:[%s61 + $0x168] sm:$0xff]
    %v108 = vld [vmem:[%s61 + $0x170] sm:$0xff]
    %v109 = vld [vmem:[%s61 + $0x178] sm:$0xff]
    %v110 = vld [vmem:[%s61 + $0x180] sm:$0xff]
    %v111 = vld [vmem:[%s61 + $0x188] sm:$0xff]
    %v112 = vld [vmem:[%s61 + $0x190] sm:$0xff]
    %v113 = vld [vmem:[%s61 + $0x198] sm:$0xff]
    %v114 = vld [vmem:[%s61 + $0x1a0] sm:$0xff]
    %v115 = vld [vmem:[%s61 + $0x1a8] sm:$0xff]
    %v116 = vld [vmem:[%s61 + $0x1b0] sm:$0xff]
    %v117 = vld [vmem:[%s61 + $0x1b8] sm:$0xff]
    %v118 = vld [vmem:[%s61 + $0x1c0] sm:$0xff]
    %v119 = vld [vmem:[%s61 + $0x1c8] sm:$0xff]
    %v120 = vld [vmem:[%s61 + $0x1d0] sm:$0xff]
    %v121 = vld [vmem:[%s61 + $0x1d8] sm:$0xff]
    %v122 = vld [vmem:[%s61 + $0x1e0] sm:$0xff]
    %v123 = vld [vmem:[%s61 + $0x1e8] sm:$0xff]
    %v124 = vld [vmem:[%s61 + $0x1f0] sm:$0xff]
    %v125 = vld [vmem:[%s61 + $0x1f8] sm:$0xff]
    %v126 = vld [vmem:[%s61 + $0x200] sm:$0xff]
    %v127 = vld [vmem:[%s61 + $0x208] sm:$0xff]
    %v128 = vld [vmem:[%s61 + $0x210] sm:$0xff]
    %v129 = vld [vmem:[%s61 + $0x218] sm:$0xff]
    %v130 = vld [vmem:[%s61 + $0x220] sm:$0xff]
    %v131 = vld [vmem:[%s61 + $0x228] sm:$0xff]
    %v132 = vld [vmem:[%s61 + $0x230] sm:$0xff]
    %v133 = vld [vmem:[%s61 + $0x238] sm:$0xff]
    %v134 = vld [vmem:[%s61 + $0x240] sm:$0xff]
    %v135 = vld [vmem:[%s61 + $0x248] sm:$0xff]
    %v136 = vld [vmem:[%s61 + $0x250] sm:$0xff]
    %v137 = vld [vmem:[%s61 + $0x258] sm:$0xff]
    %v138 = vld [vmem:[%s61 + $0x260] sm:$0xff]
    %v139 = vld [vmem:[%s61 + $0x268] sm:$0xff]
    %v140 = vld [vmem:[%s61 + $0x270] sm:$0xff]
    %v141 = vld [vmem:[%s61 + $0x278] sm:$0xff]
    %v142 = vld [vmem:[%s61 + $0x280] sm:$0xff]
    %v143 = vld [vmem:[%s61 + $0x288] sm:$0xff]
    %v144 = vld [vmem:[%s61 + $0x290] sm:$0xff]
    %v145 = vld [vmem:[%s61 + $0x298] sm:$0xff]
    %v146 = vld [vmem:[%s61 + $0x2a0] sm:$0xff]
    %v147 = vld [vmem:[%s61 + $0x2a8] sm:$0xff]
    %v148 = vld [vmem:[%s61 + $0x2b0] sm:$0xff]
    %v149 = vld [vmem:[%s61 + $0x2b8] sm:$0xff]
    %v150 = vld [vmem:[%s61 + $0x2c0] sm:$0xff]
    %v151 = vld [vmem:[%s61 + $0x2c8] sm:$0xff]
    %v152 = vld [vmem:[%s61 + $0x2d0] sm:$0xff]
    %v153 = vld [vmem:[%s61 + $0x2d8] sm:$0xff]
    %v154 = vld [vmem:[%s61 + $0x2e0] sm:$0xff]
    %v155 = vld [vmem:[%s61 + $0x2e8] sm:$0xff]
    %v156 = vld [vmem:[%s61 + $0x2f0] sm:$0xff]
    %v157 = vld [vmem:[%s61 + $0x2f8] sm:$0xff]
    %v158 = vld [vmem:[%s61 + $0x300] sm:$0xff]
    %v159 = vld [vmem:[%s61 + $0x308] sm:$0xff]
    %v160 = vld [vmem:[%s61 + $0x310] sm:$0xff]
    %v161 = vld [vmem:[%s61 + $0x318] sm:$0xff]
    %v162 = vld [vmem:[%s61 + $0x320] sm:$0xff]
    %v163 = vld [vmem:[%s61 + $0x328] sm:$0xff]
    %v164 = vld [vmem:[%s61 + $0x330] sm:$0xff]
    %v165 = vld [vmem:[%s61 + $0x338] sm:$0xff]
    %v166 = vld [vmem:[%s61 + $0x340] sm:$0xff]
    %v167 = vld [vmem:[%s61 + $0x348] sm:$0xff]
    %v168 = vld [vmem:[%s61 + $0x350] sm:$0xff]
    %v169 = vld [vmem:[%s61 + $0x358] sm:$0xff]
    %v170 = vld [vmem:[%s61 + $0x360] sm:$0xff]
    %v171 = vld [vmem:[%s61 + $0x368] sm:$0xff]
    %v172 = vld [vmem:[%s61 + $0x370] sm:$0xff]
    %v173 = vld [vmem:[%s61 + $0x378] sm:$0xff]
    %v174 = vld [vmem:[%s61 + $0x380] sm:$0xff]
    %v175 = vld [vmem:[%s61 + $0x388] sm:$0xff]
    %v176 = vld [vmem:[%s61 + $0x390] sm:$0xff]
    %v177 = vld [vmem:[%s61 + $0x398] sm:$0xff]
    %v178 = vld [vmem:[%s61 + $0x3a0] sm:$0xff]
    %v179 = vld [vmem:[%s61 + $0x3a8] sm:$0xff]
    %v180 = vld [vmem:[%s61 + $0x3b0] sm:$0xff]
    %v181 = vld [vmem:[%s61 + $0x3b8] sm:$0xff]
    %v182 = vld [vmem:[%s61 + $0x3c0] sm:$0xff]
    %v183 = vld [vmem:[%s61 + $0x3c8] sm:$0xff]
    %v184 = vld [vmem:[%s61 + $0x3d0] sm:$0xff]
    %v185 = vld [vmem:[%s61 + $0x3d8] sm:$0xff]
    %v186 = vld [vmem:[%s61 + $0x3e0] sm:$0xff]
    %v187 = vld [vmem:[%s61 + $0x3e8] sm:$0xff]
    %v188 = vld [vmem:[%s61 + $0x3f0] sm:$0xff]
    %v189 = vld [vmem:[%s61 + $0x3f8] sm:$0xff]
    %v190 = vld [vmem:[%s61 + $0x400] sm:$0xff]
    %v191 = vld [vmem:[%s61 + $0x408] sm:$0xff]
    %v192 = vld [vmem:[%s61 + $0x410] sm:$0xff]
    %v193 = vld [vmem:[%s61 + $0x418] sm:$0xff]
    %v194 = vld [vmem:[%s61 + $0x420] sm:$0xff]
    %v195 = vld [vmem:[%s61 + $0x428] sm:$0xff]
    %v196 = vld [vmem:[%s61 + $0x430] sm:$0xff]
    %v197 = vld [vmem:[%s61 + $0x438] sm:$0xff]
    %v198 = vld [vmem:[%s61 + $0x440] sm:$0xff]
    %v199 = vld [vmem:[%s61 + $0x448] sm:$0xff]
    %v200 = vld [vmem:[%s61 + $0x450] sm:$0xff]
    %v201 = vld [vmem:[%s61 + $0x458] sm:$0xff]
    %v202 = vld [vmem:[%s61 + $0x460] sm:$0xff]
    %v203 = vld [vmem:[%s61 + $0x468] sm:$0xff]
    %v204 = vld [vmem:[%s61 + $0x470] sm:$0xff]
    %v205 = vld [vmem:[%s61 + $0x478] sm:$0xff]
    %v206 = vld [vmem:[%s61 + $0x480] sm:$0xff]
    %v207 = vld [vmem:[%s61 + $0x488] sm:$0xff]
    %v208 = vld [vmem:[%s61 + $0x490] sm:$0xff]
    %v209 = vld [vmem:[%s61 + $0x498] sm:$0xff]
    %v210 = vld [vmem:[%s61 + $0x4a0] sm:$0xff]
    %v211 = vld [vmem:[%s61 + $0x4a8] sm:$0xff]
    %v212 = vld [vmem:[%s61 + $0x4b0] sm:$0xff]
    %v213 = vld [vmem:[%s61 + $0x4b8] sm:$0xff]
    %v214 = vld [vmem:[%s61 + $0x4c0] sm:$0xff]
    %v215 = vld [vmem:[%s61 + $0x4c8] sm:$0xff]
    %v216 = vld [vmem:[%s61 + $0x4d0] sm:$0xff]
    %v217 = vld [vmem:[%s61 + $0x4d8] sm:$0xff]
    %v218 = vld [vmem:[%s61 + $0x4e0] sm:$0xff]
    %v219 = vld [vmem:[%s61 + $0x4e8] sm:$0xff]
    %v220 = vld [vmem:[%s61 + $0x4f0] sm:$0xff]
    %v221 = vld [vmem:[%s61 + $0x4f8] sm:$0xff]
    %v222 = vld [vmem:[%s61 + $0x500] sm:$0xff]
    %v223 = vld [vmem:[%s61 + $0x508] sm:$0xff]
    %v224 = vld [vmem:[%s61 + $0x510] sm:$0xff]
    %v225 = vld [vmem:[%s61 + $0x518] sm:$0xff]
    %v226 = vld [vmem:[%s61 + $0x520] sm:$0xff]
    %v227 = vld [vmem:[%s61 + $0x528] sm:$0xff]
    %v228 = vld [vmem:[%s61 + $0x530] sm:$0xff]
    %v229 = vld [vmem:[%s61 + $0x538] sm:$0xff]
    %v230 = vld [vmem:[%s61 + $0x540] sm:$0xff]
    %v231 = vld [vmem:[%s61 + $0x548] sm:$0xff]
    %v232 = vld [vmem:[%s61 + $0x550] sm:$0xff]
    %v233 = vld [vmem:[%s61 + $0x558] sm:$0xff]
    %v234 = vld [vmem:[%s61 + $0x560] sm:$0xff]
    %v235 = vld [vmem:[%s61 + $0x568] sm:$0xff]
    %v236 = vld [vmem:[%s61 + $0x570] sm:$0xff]
    %v237 = vld [vmem:[%s61 + $0x578] sm:$0xff]
    %v238 = vld [vmem:[%s61 + $0x580] sm:$0xff]
    %v239 = vld [vmem:[%s61 + $0x588] sm:$0xff]
    %v240 = vld [vmem:[%s61 + $0x590] sm:$0xff]
    %v241 = vld [vmem:[%s61 + $0x598] sm:$0xff]
    %v242 = vld [vmem:[%s61 + $0x5a0] sm:$0xff]
    %v243 = vld [vmem:[%s61 + $0x5a8] sm:$0xff]
    %v244 = vld [vmem:[%s61 + $0x5b0] sm:$0xff]
    %v245 = vld [vmem:[%s61 + $0x5b8] sm:$0xff]
    %v246 = vld [vmem:[%s61 + $0x5c0] sm:$0xff]
    %v247 = vld [vmem:[%s61 + $0x5c8] sm:$0xff]
    %v248 = vld [vmem:[%s61 + $0x5d0] sm:$0xff]
    %v249 = vld [vmem:[%s61 + $0x5d8] sm:$0xff]
    %v250 = vld [vmem:[%s61 + $0x5e0] sm:$0xff]
    %v251 = vld [vmem:[%s61 + $0x5e8] sm:$0xff]
    %v252 = vld [vmem:[%s61 + $0x5f0] sm:$0xff]
    %v253 = vld [vmem:[%s61 + $0x5f8] sm:$0xff]
    %v254 = vld [vmem:[%s61 + $0x600] sm:$0xff]
    %v255 = vld [vmem:[%s61 + $0x608] sm:$0xff]
    %v256 = vld [vmem:[%s61 + $0x610] sm:$0xff]
    %v257 = vld [vmem:[%s61 + $0x618] sm:$0xff]
    %v258 = vld [vmem:[%s61 + $0x620] sm:$0xff]
    %v259 = vld [vmem:[%s61 + $0x628] sm:$0xff]
    %v260 = vld [vmem:[%s61 + $0x630] sm:$0xff]
    %v261 = vld [vmem:[%s61 + $0x638] sm:$0xff]
    %v262 = vld [vmem:[%s61 + $0x640] sm:$0xff]
    %v263 = vld [vmem:[%s61 + $0x648] sm:$0xff]
    %v264 = vld [vmem:[%s61 + $0x650] sm:$0xff]
    %v265 = vld [vmem:[%s61 + $0x658] sm:$0xff]
    %v266 = vld [vmem:[%s61 + $0x660] sm:$0xff]
    %v267 = vld [vmem:[%s61 + $0x668] sm:$0xff]
    %v268 = vld [vmem:[%s61 + $0x670] sm:$0xff]
    %v269 = vld [vmem:[%s61 + $0x678] sm:$0xff]
    %v270 = vld [vmem:[%s61 + $0x680] sm:$0xff]
    %v271 = vld [vmem:[%s61 + $0x688] sm:$0xff]
    %v272 = vld [vmem:[%s61 + $0x690] sm:$0xff]
    %v273 = vld [vmem:[%s61 + $0x698] sm:$0xff]
    %v274 = vld [vmem:[%s61 + $0x6a0] sm:$0xff]
    %v275 = vld [vmem:[%s61 + $0x6a8] sm:$0xff]
    %v276 = vld [vmem:[%s61 + $0x6b0] sm:$0xff]
    %v277 = vld [vmem:[%s61 + $0x6b8] sm:$0xff]
    %v278 = vld [vmem:[%s61 + $0x6c0] sm:$0xff]
    %v279 = vld [vmem:[%s61 + $0x6c8] sm:$0xff]
    %v280 = vld [vmem:[%s61 + $0x6d0] sm:$0xff]
    %v281 = vld [vmem:[%s61 + $0x6d8] sm:$0xff]
    %v282 = vld [vmem:[%s61 + $0x6e0] sm:$0xff]
    %v283 = vld [vmem:[%s61 + $0x6e8] sm:$0xff]
    %v284 = vld [vmem:[%s61 + $0x6f0] sm:$0xff]
    %v285 = vld [vmem:[%s61 + $0x6f8] sm:$0xff]
    %v286 = vld [vmem:[%s61 + $0x700] sm:$0xff]
    %v287 = vld [vmem:[%s61 + $0x708] sm:$0xff]
    %v288 = vld [vmem:[%s61 + $0x710] sm:$0xff]
    %v289 = vld [vmem:[%s61 + $0x718] sm:$0xff]
    %v290 = vld [vmem:[%s61 + $0x720] sm:$0xff]
    %v291 = vld [vmem:[%s61 + $0x728] sm:$0xff]
    %v292 = vld [vmem:[%s61 + $0x730] sm:$0xff]
    %v293 = vld [vmem:[%s61 + $0x738] sm:$0xff]
    %v294 = vld [vmem:[%s61 + $0x740] sm:$0xff]
    %v295 = vld [vmem:[%s61 + $0x748] sm:$0xff]
    %v296 = vld [vmem:[%s61 + $0x750] sm:$0xff]
    %v297 = vld [vmem:[%s61 + $0x758] sm:$0xff]
    %v298 = vld [vmem:[%s61 + $0x760] sm:$0xff]
    %v299 = vld [vmem:[%s61 + $0x768] sm:$0xff]
    %v300 = vld [vmem:[%s61 + $0x770] sm:$0xff]
    %v301 = vld [vmem:[%s61 + $0x778] sm:$0xff]
    %v302 = vld [vmem:[%s61 + $0x780] sm:$0xff]
    %v303 = vld [vmem:[%s61 + $0x788] sm:$0xff]
    %v304 = vld [vmem:[%s61 + $0x790] sm:$0xff]
    %v305 = vld [vmem:[%s61 + $0x798] sm:$0xff]
    %v306 = vld [vmem:[%s61 + $0x7a0] sm:$0xff]
    %v307 = vld [vmem:[%s61 + $0x7a8] sm:$0xff]
    %v308 = vld [vmem:[%s61 + $0x7b0] sm:$0xff]
    %v309 = vld [vmem:[%s61 + $0x7b8] sm:$0xff]
    %v310 = vld [vmem:[%s61 + $0x7c0] sm:$0xff]
    %v311 = vld [vmem:[%s61 + $0x7c8] sm:$0xff]
    %v312 = vld [vmem:[%s61 + $0x7d0] sm:$0xff]
    %v313 = vld [vmem:[%s61 + $0x7d8] sm:$0xff]
    %v314 = vld [vmem:[%s61 + $0x7e0] sm:$0xff]
    %v315 = vld [vmem:[%s61 + $0x7e8] sm:$0xff]
    %v316 = vld [vmem:[%s61 + $0x7f0] sm:$0xff]
    %v317 = vld [vmem:[%s61 + $0x7f8] sm:$0xff]
    %v318 = vld [vmem:[#allocation2] sm:$0xff]
    %v319 = vld [vmem:[#allocation2 + $0x8] sm:$0xff]
    %v320 = vld [vmem:[#allocation2 + $0x10] sm:$0xff]
    %v321 = vld [vmem:[#allocation2 + $0x18] sm:$0xff]
    %v578 = vunpack.c.l.b16 %v62
    %v579 = vunpack.c.h.b16 %v62
    %v580 = vunpack.c.l.b16 %v63
    %v581 = vunpack.c.h.b16 %v63
    %v582 = vunpack.c.l.b16 %v64
    %v583 = vunpack.c.h.b16 %v64
    %v584 = vunpack.c.l.b16 %v65
    %v585 = vunpack.c.h.b16 %v65
    %v586 = vunpack.c.l.b16 %v66
    %v587 = vunpack.c.h.b16 %v66
    %v588 = vunpack.c.l.b16 %v67
    %v589 = vunpack.c.h.b16 %v67
    %v590 = vunpack.c.l.b16 %v68
    %v591 = vunpack.c.h.b16 %v68
    %v592 = vunpack.c.l.b16 %v69
    %v593 = vunpack.c.h.b16 %v69
    %v594 = vunpack.c.l.b16 %v70
    %v595 = vunpack.c.h.b16 %v70
    %v596 = vunpack.c.l.b16 %v71
    %v597 = vunpack.c.h.b16 %v71
    %v598 = vunpack.c.l.b16 %v72
    %v599 = vunpack.c.h.b16 %v72
    %v600 = vunpack.c.l.b16 %v73
    %v601 = vunpack.c.h.b16 %v73
    %v602 = vunpack.c.l.b16 %v74
    %v603 = vunpack.c.h.b16 %v74
    %v604 = vunpack.c.l.b16 %v75
    %v605 = vunpack.c.h.b16 %v75
    %v606 = vunpack.c.l.b16 %v76
    %v607 = vunpack.c.h.b16 %v76
    %v608 = vunpack.c.l.b16 %v77
    %v609 = vunpack.c.h.b16 %v77
    %v610 = vunpack.c.l.b16 %v78
    %v611 = vunpack.c.h.b16 %v78
    %v612 = vunpack.c.l.b16 %v79
    %v613 = vunpack.c.h.b16 %v79
    %v614 = vunpack.c.l.b16 %v80
    %v615 = vunpack.c.h.b16 %v80
    %v616 = vunpack.c.l.b16 %v81
    %v617 = vunpack.c.h.b16 %v81
    %v618 = vunpack.c.l.b16 %v82
    %v619 = vunpack.c.h.b16 %v82
    %v620 = vunpack.c.l.b16 %v83
    %v621 = vunpack.c.h.b16 %v83
    %v622 = vunpack.c.l.b16 %v84
    %v623 = vunpack.c.h.b16 %v84
    %v624 = vunpack.c.l.b16 %v85
    %v625 = vunpack.c.h.b16 %v85
    %v626 = vunpack.c.l.b16 %v86
    %v627 = vunpack.c.h.b16 %v86
    %v628 = vunpack.c.l.b16 %v87
    %v629 = vunpack.c.h.b16 %v87
    %v630 = vunpack.c.l.b16 %v88
    %v631 = vunpack.c.h.b16 %v88
    %v632 = vunpack.c.l.b16 %v89
    %v633 = vunpack.c.h.b16 %v89
    %v634 = vunpack.c.l.b16 %v90
    %v635 = vunpack.c.h.b16 %v90
    %v636 = vunpack.c.l.b16 %v91
    %v637 = vunpack.c.h.b16 %v91
    %v638 = vunpack.c.l.b16 %v92
    %v639 = vunpack.c.h.b16 %v92
    %v640 = vunpack.c.l.b16 %v93
    %v641 = vunpack.c.h.b16 %v93
    %v642 = vunpack.c.l.b16 %v94
    %v643 = vunpack.c.h.b16 %v94
    %v644 = vunpack.c.l.b16 %v95
    %v645 = vunpack.c.h.b16 %v95
    %v646 = vunpack.c.l.b16 %v96
    %v647 = vunpack.c.h.b16 %v96
    %v648 = vunpack.c.l.b16 %v97
    %v649 = vunpack.c.h.b16 %v97
    %v650 = vunpack.c.l.b16 %v98
    %v651 = vunpack.c.h.b16 %v98
    %v652 = vunpack.c.l.b16 %v99
    %v653 = vunpack.c.h.b16 %v99
    %v654 = vunpack.c.l.b16 %v100
    %v655 = vunpack.c.h.b16 %v100
    %v656 = vunpack.c.l.b16 %v101
    %v657 = vunpack.c.h.b16 %v101
    %v658 = vunpack.c.l.b16 %v102
    %v659 = vunpack.c.h.b16 %v102
    %v660 = vunpack.c.l.b16 %v103
    %v661 = vunpack.c.h.b16 %v103
    %v662 = vunpack.c.l.b16 %v104
    %v663 = vunpack.c.h.b16 %v104
    %v664 = vunpack.c.l.b16 %v105
    %v665 = vunpack.c.h.b16 %v105
    %v666 = vunpack.c.l.b16 %v106
    %v667 = vunpack.c.h.b16 %v106
    %v668 = vunpack.c.l.b16 %v107
    %v669 = vunpack.c.h.b16 %v107
    %v670 = vunpack.c.l.b16 %v108
    %v671 = vunpack.c.h.b16 %v108
    %v672 = vunpack.c.l.b16 %v109
    %v673 = vunpack.c.h.b16 %v109
    %v674 = vunpack.c.l.b16 %v110
    %v675 = vunpack.c.h.b16 %v110
    %v676 = vunpack.c.l.b16 %v111
    %v677 = vunpack.c.h.b16 %v111
    %v678 = vunpack.c.l.b16 %v112
    %v679 = vunpack.c.h.b16 %v112
    %v680 = vunpack.c.l.b16 %v113
    %v681 = vunpack.c.h.b16 %v113
    %v682 = vunpack.c.l.b16 %v114
    %v683 = vunpack.c.h.b16 %v114
    %v684 = vunpack.c.l.b16 %v115
    %v685 = vunpack.c.h.b16 %v115
    %v686 = vunpack.c.l.b16 %v116
    %v687 = vunpack.c.h.b16 %v116
    %v688 = vunpack.c.l.b16 %v117
    %v689 = vunpack.c.h.b16 %v117
    %v690 = vunpack.c.l.b16 %v118
    %v691 = vunpack.c.h.b16 %v118
    %v692 = vunpack.c.l.b16 %v119
    %v693 = vunpack.c.h.b16 %v119
    %v694 = vunpack.c.l.b16 %v120
    %v695 = vunpack.c.h.b16 %v120
    %v696 = vunpack.c.l.b16 %v121
    %v697 = vunpack.c.h.b16 %v121
    %v698 = vunpack.c.l.b16 %v122
    %v699 = vunpack.c.h.b16 %v122
    %v700 = vunpack.c.l.b16 %v123
    %v701 = vunpack.c.h.b16 %v123
    %v702 = vunpack.c.l.b16 %v124
    %v703 = vunpack.c.h.b16 %v124
    %v704 = vunpack.c.l.b16 %v125
    %v705 = vunpack.c.h.b16 %v125
    %v706 = vunpack.c.l.b16 %v126
    %v707 = vunpack.c.h.b16 %v126
    %v708 = vunpack.c.l.b16 %v127
    %v709 = vunpack.c.h.b16 %v127
    %v710 = vunpack.c.l.b16 %v128
    %v711 = vunpack.c.h.b16 %v128
    %v712 = vunpack.c.l.b16 %v129
    %v713 = vunpack.c.h.b16 %v129
    %v714 = vunpack.c.l.b16 %v130
    %v715 = vunpack.c.h.b16 %v130
    %v716 = vunpack.c.l.b16 %v131
    %v717 = vunpack.c.h.b16 %v131
    %v718 = vunpack.c.l.b16 %v132
    %v719 = vunpack.c.h.b16 %v132
    %v720 = vunpack.c.l.b16 %v133
    %v721 = vunpack.c.h.b16 %v133
    %v722 = vunpack.c.l.b16 %v134
    %v723 = vunpack.c.h.b16 %v134
    %v724 = vunpack.c.l.b16 %v135
    %v725 = vunpack.c.h.b16 %v135
    %v726 = vunpack.c.l.b16 %v136
    %v727 = vunpack.c.h.b16 %v136
    %v728 = vunpack.c.l.b16 %v137
    %v729 = vunpack.c.h.b16 %v137
    %v730 = vunpack.c.l.b16 %v138
    %v731 = vunpack.c.h.b16 %v138
    %v732 = vunpack.c.l.b16 %v139
    %v733 = vunpack.c.h.b16 %v139
    %v734 = vunpack.c.l.b16 %v140
    %v735 = vunpack.c.h.b16 %v140
    %v736 = vunpack.c.l.b16 %v141
    %v737 = vunpack.c.h.b16 %v141
    %v738 = vunpack.c.l.b16 %v142
    %v739 = vunpack.c.h.b16 %v142
    %v740 = vunpack.c.l.b16 %v143
    %v741 = vunpack.c.h.b16 %v143
    %v742 = vunpack.c.l.b16 %v144
    %v743 = vunpack.c.h.b16 %v144
    %v744 = vunpack.c.l.b16 %v145
    %v745 = vunpack.c.h.b16 %v145
    %v746 = vunpack.c.l.b16 %v146
    %v747 = vunpack.c.h.b16 %v146
    %v748 = vunpack.c.l.b16 %v147
    %v749 = vunpack.c.h.b16 %v147
    %v750 = vunpack.c.l.b16 %v148
    %v751 = vunpack.c.h.b16 %v148
    %v752 = vunpack.c.l.b16 %v149
    %v753 = vunpack.c.h.b16 %v149
    %v754 = vunpack.c.l.b16 %v150
    %v755 = vunpack.c.h.b16 %v150
    %v756 = vunpack.c.l.b16 %v151
    %v757 = vunpack.c.h.b16 %v151
    %v758 = vunpack.c.l.b16 %v152
    %v759 = vunpack.c.h.b16 %v152
    %v760 = vunpack.c.l.b16 %v153
    %v761 = vunpack.c.h.b16 %v153
    %v762 = vunpack.c.l.b16 %v154
    %v763 = vunpack.c.h.b16 %v154
    %v764 = vunpack.c.l.b16 %v155
    %v765 = vunpack.c.h.b16 %v155
    %v766 = vunpack.c.l.b16 %v156
    %v767 = vunpack.c.h.b16 %v156
    %v768 = vunpack.c.l.b16 %v157
    %v769 = vunpack.c.h.b16 %v157
    %v770 = vunpack.c.l.b16 %v158
    %v771 = vunpack.c.h.b16 %v158
    %v772 = vunpack.c.l.b16 %v159
    %v773 = vunpack.c.h.b16 %v159
    %v774 = vunpack.c.l.b16 %v160
    %v775 = vunpack.c.h.b16 %v160
    %v776 = vunpack.c.l.b16 %v161
    %v777 = vunpack.c.h.b16 %v161
    %v778 = vunpack.c.l.b16 %v162
    %v779 = vunpack.c.h.b16 %v162
    %v780 = vunpack.c.l.b16 %v163
    %v781 = vunpack.c.h.b16 %v163
    %v782 = vunpack.c.l.b16 %v164
    %v783 = vunpack.c.h.b16 %v164
    %v784 = vunpack.c.l.b16 %v165
    %v785 = vunpack.c.h.b16 %v165
    %v786 = vunpack.c.l.b16 %v166
    %v787 = vunpack.c.h.b16 %v166
    %v788 = vunpack.c.l.b16 %v167
    %v789 = vunpack.c.h.b16 %v167
    %v790 = vunpack.c.l.b16 %v168
    %v791 = vunpack.c.h.b16 %v168
    %v792 = vunpack.c.l.b16 %v169
    %v793 = vunpack.c.h.b16 %v169
    %v794 = vunpack.c.l.b16 %v170
    %v795 = vunpack.c.h.b16 %v170
    %v796 = vunpack.c.l.b16 %v171
    %v797 = vunpack.c.h.b16 %v171
    %v798 = vunpack.c.l.b16 %v172
    %v799 = vunpack.c.h.b16 %v172
    %v800 = vunpack.c.l.b16 %v173
    %v801 = vunpack.c.h.b16 %v173
    %v802 = vunpack.c.l.b16 %v174
    %v803 = vunpack.c.h.b16 %v174
    %v804 = vunpack.c.l.b16 %v175
    %v805 = vunpack.c.h.b16 %v175
    %v806 = vunpack.c.l.b16 %v176
    %v807 = vunpack.c.h.b16 %v176
    %v808 = vunpack.c.l.b16 %v177
    %v809 = vunpack.c.h.b16 %v177
    %v810 = vunpack.c.l.b16 %v178
    %v811 = vunpack.c.h.b16 %v178
    %v812 = vunpack.c.l.b16 %v179
    %v813 = vunpack.c.h.b16 %v179
    %v814 = vunpack.c.l.b16 %v180
    %v815 = vunpack.c.h.b16 %v180
    %v816 = vunpack.c.l.b16 %v181
    %v817 = vunpack.c.h.b16 %v181
    %v818 = vunpack.c.l.b16 %v182
    %v819 = vunpack.c.h.b16 %v182
    %v820 = vunpack.c.l.b16 %v183
    %v821 = vunpack.c.h.b16 %v183
    %v822 = vunpack.c.l.b16 %v184
    %v823 = vunpack.c.h.b16 %v184
    %v824 = vunpack.c.l.b16 %v185
    %v825 = vunpack.c.h.b16 %v185
    %v826 = vunpack.c.l.b16 %v186
    %v827 = vunpack.c.h.b16 %v186
    %v828 = vunpack.c.l.b16 %v187
    %v829 = vunpack.c.h.b16 %v187
    %v830 = vunpack.c.l.b16 %v188
    %v831 = vunpack.c.h.b16 %v188
    %v832 = vunpack.c.l.b16 %v189
    %v833 = vunpack.c.h.b16 %v189
    %v834 = vunpack.c.l.b16 %v190
    %v835 = vunpack.c.h.b16 %v190
    %v836 = vunpack.c.l.b16 %v191
    %v837 = vunpack.c.h.b16 %v191
    %v838 = vunpack.c.l.b16 %v192
    %v839 = vunpack.c.h.b16 %v192
    %v840 = vunpack.c.l.b16 %v193
    %v841 = vunpack.c.h.b16 %v193
    %v842 = vunpack.c.l.b16 %v194
    %v843 = vunpack.c.h.b16 %v194
    %v844 = vunpack.c.l.b16 %v195
    %v845 = vunpack.c.h.b16 %v195
    %v846 = vunpack.c.l.b16 %v196
    %v847 = vunpack.c.h.b16 %v196
    %v848 = vunpack.c.l.b16 %v197
    %v849 = vunpack.c.h.b16 %v197
    %v850 = vunpack.c.l.b16 %v198
    %v851 = vunpack.c.h.b16 %v198
    %v852 = vunpack.c.l.b16 %v199
    %v853 = vunpack.c.h.b16 %v199
    %v854 = vunpack.c.l.b16 %v200
    %v855 = vunpack.c.h.b16 %v200
    %v856 = vunpack.c.l.b16 %v201
    %v857 = vunpack.c.h.b16 %v201
    %v858 = vunpack.c.l.b16 %v202
    %v859 = vunpack.c.h.b16 %v202
    %v860 = vunpack.c.l.b16 %v203
    %v861 = vunpack.c.h.b16 %v203
    %v862 = vunpack.c.l.b16 %v204
    %v863 = vunpack.c.h.b16 %v204
    %v864 = vunpack.c.l.b16 %v205
    %v865 = vunpack.c.h.b16 %v205
    %v866 = vunpack.c.l.b16 %v206
    %v867 = vunpack.c.h.b16 %v206
    %v868 = vunpack.c.l.b16 %v207
    %v869 = vunpack.c.h.b16 %v207
    %v870 = vunpack.c.l.b16 %v208
    %v871 = vunpack.c.h.b16 %v208
    %v872 = vunpack.c.l.b16 %v209
    %v873 = vunpack.c.h.b16 %v209
    %v874 = vunpack.c.l.b16 %v210
    %v875 = vunpack.c.h.b16 %v210
    %v876 = vunpack.c.l.b16 %v211
    %v877 = vunpack.c.h.b16 %v211
    %v878 = vunpack.c.l.b16 %v212
    %v879 = vunpack.c.h.b16 %v212
    %v880 = vunpack.c.l.b16 %v213
    %v881 = vunpack.c.h.b16 %v213
    %v882 = vunpack.c.l.b16 %v214
    %v883 = vunpack.c.h.b16 %v214
    %v884 = vunpack.c.l.b16 %v215
    %v885 = vunpack.c.h.b16 %v215
    %v886 = vunpack.c.l.b16 %v216
    %v887 = vunpack.c.h.b16 %v216
    %v888 = vunpack.c.l.b16 %v217
    %v889 = vunpack.c.h.b16 %v217
    %v890 = vunpack.c.l.b16 %v218
    %v891 = vunpack.c.h.b16 %v218
    %v892 = vunpack.c.l.b16 %v219
    %v893 = vunpack.c.h.b16 %v219
    %v894 = vunpack.c.l.b16 %v220
    %v895 = vunpack.c.h.b16 %v220
    %v896 = vunpack.c.l.b16 %v221
    %v897 = vunpack.c.h.b16 %v221
    %v898 = vunpack.c.l.b16 %v222
    %v899 = vunpack.c.h.b16 %v222
    %v900 = vunpack.c.l.b16 %v223
    %v901 = vunpack.c.h.b16 %v223
    %v902 = vunpack.c.l.b16 %v224
    %v903 = vunpack.c.h.b16 %v224
    %v904 = vunpack.c.l.b16 %v225
    %v905 = vunpack.c.h.b16 %v225
    %v906 = vunpack.c.l.b16 %v226
    %v907 = vunpack.c.h.b16 %v226
    %v908 = vunpack.c.l.b16 %v227
    %v909 = vunpack.c.h.b16 %v227
    %v910 = vunpack.c.l.b16 %v228
    %v911 = vunpack.c.h.b16 %v228
    %v912 = vunpack.c.l.b16 %v229
    %v913 = vunpack.c.h.b16 %v229
    %v914 = vunpack.c.l.b16 %v230
    %v915 = vunpack.c.h.b16 %v230
    %v916 = vunpack.c.l.b16 %v231
    %v917 = vunpack.c.h.b16 %v231
    %v918 = vunpack.c.l.b16 %v232
    %v919 = vunpack.c.h.b16 %v232
    %v920 = vunpack.c.l.b16 %v233
    %v921 = vunpack.c.h.b16 %v233
    %v922 = vunpack.c.l.b16 %v234
    %v923 = vunpack.c.h.b16 %v234
    %v924 = vunpack.c.l.b16 %v235
    %v925 = vunpack.c.h.b16 %v235
    %v926 = vunpack.c.l.b16 %v236
    %v927 = vunpack.c.h.b16 %v236
    %v928 = vunpack.c.l.b16 %v237
    %v929 = vunpack.c.h.b16 %v237
    %v930 = vunpack.c.l.b16 %v238
    %v931 = vunpack.c.h.b16 %v238
    %v932 = vunpack.c.l.b16 %v239
    %v933 = vunpack.c.h.b16 %v239
    %v934 = vunpack.c.l.b16 %v240
    %v935 = vunpack.c.h.b16 %v240
    %v936 = vunpack.c.l.b16 %v241
    %v937 = vunpack.c.h.b16 %v241
    %v938 = vunpack.c.l.b16 %v242
    %v939 = vunpack.c.h.b16 %v242
    %v940 = vunpack.c.l.b16 %v243
    %v941 = vunpack.c.h.b16 %v243
    %v942 = vunpack.c.l.b16 %v244
    %v943 = vunpack.c.h.b16 %v244
    %v944 = vunpack.c.l.b16 %v245
    %v945 = vunpack.c.h.b16 %v245
    %v946 = vunpack.c.l.b16 %v246
    %v947 = vunpack.c.h.b16 %v246
    %v948 = vunpack.c.l.b16 %v247
    %v949 = vunpack.c.h.b16 %v247
    %v950 = vunpack.c.l.b16 %v248
    %v951 = vunpack.c.h.b16 %v248
    %v952 = vunpack.c.l.b16 %v249
    %v953 = vunpack.c.h.b16 %v249
    %v954 = vunpack.c.l.b16 %v250
    %v955 = vunpack.c.h.b16 %v250
    %v956 = vunpack.c.l.b16 %v251
    %v957 = vunpack.c.h.b16 %v251
    %v958 = vunpack.c.l.b16 %v252
    %v959 = vunpack.c.h.b16 %v252
    %v960 = vunpack.c.l.b16 %v253
    %v961 = vunpack.c.h.b16 %v253
    %v962 = vunpack.c.l.b16 %v254
    %v963 = vunpack.c.h.b16 %v254
    %v964 = vunpack.c.l.b16 %v255
    %v965 = vunpack.c.h.b16 %v255
    %v966 = vunpack.c.l.b16 %v256
    %v967 = vunpack.c.h.b16 %v256
    %v968 = vunpack.c.l.b16 %v257
    %v969 = vunpack.c.h.b16 %v257
    %v970 = vunpack.c.l.b16 %v258
    %v971 = vunpack.c.h.b16 %v258
    %v972 = vunpack.c.l.b16 %v259
    %v973 = vunpack.c.h.b16 %v259
    %v974 = vunpack.c.l.b16 %v260
    %v975 = vunpack.c.h.b16 %v260
    %v976 = vunpack.c.l.b16 %v261
    %v977 = vunpack.c.h.b16 %v261
    %v978 = vunpack.c.l.b16 %v262
    %v979 = vunpack.c.h.b16 %v262
    %v980 = vunpack.c.l.b16 %v263
    %v981 = vunpack.c.h.b16 %v263
    %v982 = vunpack.c.l.b16 %v264
    %v983 = vunpack.c.h.b16 %v264
    %v984 = vunpack.c.l.b16 %v265
    %v985 = vunpack.c.h.b16 %v265
    %v986 = vunpack.c.l.b16 %v266
    %v987 = vunpack.c.h.b16 %v266
    %v988 = vunpack.c.l.b16 %v267
    %v989 = vunpack.c.h.b16 %v267
    %v990 = vunpack.c.l.b16 %v268
    %v991 = vunpack.c.h.b16 %v268
    %v992 = vunpack.c.l.b16 %v269
    %v993 = vunpack.c.h.b16 %v269
    %v994 = vunpack.c.l.b16 %v270
    %v995 = vunpack.c.h.b16 %v270
    %v996 = vunpack.c.l.b16 %v271
    %v997 = vunpack.c.h.b16 %v271
    %v998 = vunpack.c.l.b16 %v272
    %v999 = vunpack.c.h.b16 %v272
    %v1000 = vunpack.c.l.b16 %v273
    %v1001 = vunpack.c.h.b16 %v273
    %v1002 = vunpack.c.l.b16 %v274
    %v1003 = vunpack.c.h.b16 %v274
    %v1004 = vunpack.c.l.b16 %v275
    %v1005 = vunpack.c.h.b16 %v275
    %v1006 = vunpack.c.l.b16 %v276
    %v1007 = vunpack.c.h.b16 %v276
    %v1008 = vunpack.c.l.b16 %v277
    %v1009 = vunpack.c.h.b16 %v277
    %v1010 = vunpack.c.l.b16 %v278
    %v1011 = vunpack.c.h.b16 %v278
    %v1012 = vunpack.c.l.b16 %v279
    %v1013 = vunpack.c.h.b16 %v279
    %v1014 = vunpack.c.l.b16 %v280
    %v1015 = vunpack.c.h.b16 %v280
    %v1016 = vunpack.c.l.b16 %v281
    %v1017 = vunpack.c.h.b16 %v281
    %v1018 = vunpack.c.l.b16 %v282
    %v1019 = vunpack.c.h.b16 %v282
    %v1020 = vunpack.c.l.b16 %v283
    %v1021 = vunpack.c.h.b16 %v283
    %v1022 = vunpack.c.l.b16 %v284
    %v1023 = vunpack.c.h.b16 %v284
    %v1024 = vunpack.c.l.b16 %v285
    %v1025 = vunpack.c.h.b16 %v285
    %v1026 = vunpack.c.l.b16 %v286
    %v1027 = vunpack.c.h.b16 %v286
    %v1028 = vunpack.c.l.b16 %v287
    %v1029 = vunpack.c.h.b16 %v287
    %v1030 = vunpack.c.l.b16 %v288
    %v1031 = vunpack.c.h.b16 %v288
    %v1032 = vunpack.c.l.b16 %v289
    %v1033 = vunpack.c.h.b16 %v289
    %v1034 = vunpack.c.l.b16 %v290
    %v1035 = vunpack.c.h.b16 %v290
    %v1036 = vunpack.c.l.b16 %v291
    %v1037 = vunpack.c.h.b16 %v291
    %v1038 = vunpack.c.l.b16 %v292
    %v1039 = vunpack.c.h.b16 %v292
    %v1040 = vunpack.c.l.b16 %v293
    %v1041 = vunpack.c.h.b16 %v293
    %v1042 = vunpack.c.l.b16 %v294
    %v1043 = vunpack.c.h.b16 %v294
    %v1044 = vunpack.c.l.b16 %v295
    %v1045 = vunpack.c.h.b16 %v295
    %v1046 = vunpack.c.l.b16 %v296
    %v1047 = vunpack.c.h.b16 %v296
    %v1048 = vunpack.c.l.b16 %v297
    %v1049 = vunpack.c.h.b16 %v297
    %v1050 = vunpack.c.l.b16 %v298
    %v1051 = vunpack.c.h.b16 %v298
    %v1052 = vunpack.c.l.b16 %v299
    %v1053 = vunpack.c.h.b16 %v299
    %v1054 = vunpack.c.l.b16 %v300
    %v1055 = vunpack.c.h.b16 %v300
    %v1056 = vunpack.c.l.b16 %v301
    %v1057 = vunpack.c.h.b16 %v301
    %v1058 = vunpack.c.l.b16 %v302
    %v1059 = vunpack.c.h.b16 %v302
    %v1060 = vunpack.c.l.b16 %v303
    %v1061 = vunpack.c.h.b16 %v303
    %v1062 = vunpack.c.l.b16 %v304
    %v1063 = vunpack.c.h.b16 %v304
    %v1064 = vunpack.c.l.b16 %v305
    %v1065 = vunpack.c.h.b16 %v305
    %v1066 = vunpack.c.l.b16 %v306
    %v1067 = vunpack.c.h.b16 %v306
    %v1068 = vunpack.c.l.b16 %v307
    %v1069 = vunpack.c.h.b16 %v307
    %v1070 = vunpack.c.l.b16 %v308
    %v1071 = vunpack.c.h.b16 %v308
    %v1072 = vunpack.c.l.b16 %v309
    %v1073 = vunpack.c.h.b16 %v309
    %v1074 = vunpack.c.l.b16 %v310
    %v1075 = vunpack.c.h.b16 %v310
    %v1076 = vunpack.c.l.b16 %v311
    %v1077 = vunpack.c.h.b16 %v311
    %v1078 = vunpack.c.l.b16 %v312
    %v1079 = vunpack.c.h.b16 %v312
    %v1080 = vunpack.c.l.b16 %v313
    %v1081 = vunpack.c.h.b16 %v313
    %v1082 = vunpack.c.l.b16 %v314
    %v1083 = vunpack.c.h.b16 %v314
    %v1084 = vunpack.c.l.b16 %v315
    %v1085 = vunpack.c.h.b16 %v315
    %v1086 = vunpack.c.l.b16 %v316
    %v1087 = vunpack.c.h.b16 %v316
    %v1088 = vunpack.c.l.b16 %v317
    %v1089 = vunpack.c.h.b16 %v317
    %v1090 = vpack.c.b16 %v582, %v578
    %v1091 = vpack.c.b16 %v583, %v579
    %v1092 = vpack.c.b16 %v584, %v580
    %v1093 = vpack.c.b16 %v585, %v581
    %v1094 = vpack.c.b16 %v590, %v586
    %v1095 = vpack.c.b16 %v591, %v587
    %v1096 = vpack.c.b16 %v592, %v588
    %v1097 = vpack.c.b16 %v593, %v589
    %v1098 = vpack.c.b16 %v598, %v594
    %v1099 = vpack.c.b16 %v599, %v595
    %v1100 = vpack.c.b16 %v600, %v596
    %v1101 = vpack.c.b16 %v601, %v597
    %v1102 = vpack.c.b16 %v606, %v602
    %v1103 = vpack.c.b16 %v607, %v603
    %v1104 = vpack.c.b16 %v608, %v604
    %v1105 = vpack.c.b16 %v609, %v605
    %v1106 = vpack.c.b16 %v614, %v610
    %v1107 = vpack.c.b16 %v615, %v611
    %v1108 = vpack.c.b16 %v616, %v612
    %v1109 = vpack.c.b16 %v617, %v613
    %v1110 = vpack.c.b16 %v622, %v618
    %v1111 = vpack.c.b16 %v623, %v619
    %v1112 = vpack.c.b16 %v624, %v620
    %v1113 = vpack.c.b16 %v625, %v621
    %v1114 = vpack.c.b16 %v630, %v626
    %v1115 = vpack.c.b16 %v631, %v627
    %v1116 = vpack.c.b16 %v632, %v628
    %v1117 = vpack.c.b16 %v633, %v629
    %v1118 = vpack.c.b16 %v638, %v634
    %v1119 = vpack.c.b16 %v639, %v635
    %v1120 = vpack.c.b16 %v640, %v636
    %v1121 = vpack.c.b16 %v641, %v637
    %v1122 = vpack.c.b16 %v646, %v642
    %v1123 = vpack.c.b16 %v647, %v643
    %v1124 = vpack.c.b16 %v648, %v644
    %v1125 = vpack.c.b16 %v649, %v645
    %v1126 = vpack.c.b16 %v654, %v650
    %v1127 = vpack.c.b16 %v655, %v651
    %v1128 = vpack.c.b16 %v656, %v652
    %v1129 = vpack.c.b16 %v657, %v653
    %v1130 = vpack.c.b16 %v662, %v658
    %v1131 = vpack.c.b16 %v663, %v659
    %v1132 = vpack.c.b16 %v664, %v660
    %v1133 = vpack.c.b16 %v665, %v661
    %v1134 = vpack.c.b16 %v670, %v666
    %v1135 = vpack.c.b16 %v671, %v667
    %v1136 = vpack.c.b16 %v672, %v668
    %v1137 = vpack.c.b16 %v673, %v669
    %v1138 = vpack.c.b16 %v678, %v674
    %v1139 = vpack.c.b16 %v679, %v675
    %v1140 = vpack.c.b16 %v680, %v676
    %v1141 = vpack.c.b16 %v681, %v677
    %v1142 = vpack.c.b16 %v686, %v682
    %v1143 = vpack.c.b16 %v687, %v683
    %v1144 = vpack.c.b16 %v688, %v684
    %v1145 = vpack.c.b16 %v689, %v685
    %v1146 = vpack.c.b16 %v694, %v690
    %v1147 = vpack.c.b16 %v695, %v691
    %v1148 = vpack.c.b16 %v696, %v692
    %v1149 = vpack.c.b16 %v697, %v693
    %v1150 = vpack.c.b16 %v702, %v698
    %v1151 = vpack.c.b16 %v703, %v699
    %v1152 = vpack.c.b16 %v704, %v700
    %v1153 = vpack.c.b16 %v705, %v701
    %v1154 = vpack.c.b16 %v710, %v706
    %v1155 = vpack.c.b16 %v711, %v707
    %v1156 = vpack.c.b16 %v712, %v708
    %v1157 = vpack.c.b16 %v713, %v709
    %v1158 = vpack.c.b16 %v718, %v714
    %v1159 = vpack.c.b16 %v719, %v715
    %v1160 = vpack.c.b16 %v720, %v716
    %v1161 = vpack.c.b16 %v721, %v717
    %v1162 = vpack.c.b16 %v726, %v722
    %v1163 = vpack.c.b16 %v727, %v723
    %v1164 = vpack.c.b16 %v728, %v724
    %v1165 = vpack.c.b16 %v729, %v725
    %v1166 = vpack.c.b16 %v734, %v730
    %v1167 = vpack.c.b16 %v735, %v731
    %v1168 = vpack.c.b16 %v736, %v732
    %v1169 = vpack.c.b16 %v737, %v733
    %v1170 = vpack.c.b16 %v742, %v738
    %v1171 = vpack.c.b16 %v743, %v739
    %v1172 = vpack.c.b16 %v744, %v740
    %v1173 = vpack.c.b16 %v745, %v741
    %v1174 = vpack.c.b16 %v750, %v746
    %v1175 = vpack.c.b16 %v751, %v747
    %v1176 = vpack.c.b16 %v752, %v748
    %v1177 = vpack.c.b16 %v753, %v749
    %v1178 = vpack.c.b16 %v758, %v754
    %v1179 = vpack.c.b16 %v759, %v755
    %v1180 = vpack.c.b16 %v760, %v756
    %v1181 = vpack.c.b16 %v761, %v757
    %v1182 = vpack.c.b16 %v766, %v762
    %v1183 = vpack.c.b16 %v767, %v763
    %v1184 = vpack.c.b16 %v768, %v764
    %v1185 = vpack.c.b16 %v769, %v765
    %v1186 = vpack.c.b16 %v774, %v770
    %v1187 = vpack.c.b16 %v775, %v771
    %v1188 = vpack.c.b16 %v776, %v772
    %v1189 = vpack.c.b16 %v777, %v773
    %v1190 = vpack.c.b16 %v782, %v778
    %v1191 = vpack.c.b16 %v783, %v779
    %v1192 = vpack.c.b16 %v784, %v780
    %v1193 = vpack.c.b16 %v785, %v781
    %v1194 = vpack.c.b16 %v790, %v786
    %v1195 = vpack.c.b16 %v791, %v787
    %v1196 = vpack.c.b16 %v792, %v788
    %v1197 = vpack.c.b16 %v793, %v789
    %v1198 = vpack.c.b16 %v798, %v794
    %v1199 = vpack.c.b16 %v799, %v795
    %v1200 = vpack.c.b16 %v800, %v796
    %v1201 = vpack.c.b16 %v801, %v797
    %v1202 = vpack.c.b16 %v806, %v802
    %v1203 = vpack.c.b16 %v807, %v803
    %v1204 = vpack.c.b16 %v808, %v804
    %v1205 = vpack.c.b16 %v809, %v805
    %v1206 = vpack.c.b16 %v814, %v810
    %v1207 = vpack.c.b16 %v815, %v811
    %v1208 = vpack.c.b16 %v816, %v812
    %v1209 = vpack.c.b16 %v817, %v813
    %v1210 = vpack.c.b16 %v822, %v818
    %v1211 = vpack.c.b16 %v823, %v819
    %v1212 = vpack.c.b16 %v824, %v820
    %v1213 = vpack.c.b16 %v825, %v821
    %v1214 = vpack.c.b16 %v830, %v826
    %v1215 = vpack.c.b16 %v831, %v827
    %v1216 = vpack.c.b16 %v832, %v828
    %v1217 = vpack.c.b16 %v833, %v829
    %v1218 = vpack.c.b16 %v838, %v834
    %v1219 = vpack.c.b16 %v839, %v835
    %v1220 = vpack.c.b16 %v840, %v836
    %v1221 = vpack.c.b16 %v841, %v837
    %v1222 = vpack.c.b16 %v846, %v842
    %v1223 = vpack.c.b16 %v847, %v843
    %v1224 = vpack.c.b16 %v848, %v844
    %v1225 = vpack.c.b16 %v849, %v845
    %v1226 = vpack.c.b16 %v854, %v850
    %v1227 = vpack.c.b16 %v855, %v851
    %v1228 = vpack.c.b16 %v856, %v852
    %v1229 = vpack.c.b16 %v857, %v853
    %v1230 = vpack.c.b16 %v862, %v858
    %v1231 = vpack.c.b16 %v863, %v859
    %v1232 = vpack.c.b16 %v864, %v860
    %v1233 = vpack.c.b16 %v865, %v861
    %v1234 = vpack.c.b16 %v870, %v866
    %v1235 = vpack.c.b16 %v871, %v867
    %v1236 = vpack.c.b16 %v872, %v868
    %v1237 = vpack.c.b16 %v873, %v869
    %v1238 = vpack.c.b16 %v878, %v874
    %v1239 = vpack.c.b16 %v879, %v875
    %v1240 = vpack.c.b16 %v880, %v876
    %v1241 = vpack.c.b16 %v881, %v877
    %v1242 = vpack.c.b16 %v886, %v882
    %v1243 = vpack.c.b16 %v887, %v883
    %v1244 = vpack.c.b16 %v888, %v884
    %v1245 = vpack.c.b16 %v889, %v885
    %v1246 = vpack.c.b16 %v894, %v890
    %v1247 = vpack.c.b16 %v895, %v891
    %v1248 = vpack.c.b16 %v896, %v892
    %v1249 = vpack.c.b16 %v897, %v893
    %v1250 = vpack.c.b16 %v902, %v898
    %v1251 = vpack.c.b16 %v903, %v899
    %v1252 = vpack.c.b16 %v904, %v900
    %v1253 = vpack.c.b16 %v905, %v901
    %v1254 = vpack.c.b16 %v910, %v906
    %v1255 = vpack.c.b16 %v911, %v907
    %v1256 = vpack.c.b16 %v912, %v908
    %v1257 = vpack.c.b16 %v913, %v909
    %v1258 = vpack.c.b16 %v918, %v914
    %v1259 = vpack.c.b16 %v919, %v915
    %v1260 = vpack.c.b16 %v920, %v916
    %v1261 = vpack.c.b16 %v921, %v917
    %v1262 = vpack.c.b16 %v926, %v922
    %v1263 = vpack.c.b16 %v927, %v923
    %v1264 = vpack.c.b16 %v928, %v924
    %v1265 = vpack.c.b16 %v929, %v925
    %v1266 = vpack.c.b16 %v934, %v930
    %v1267 = vpack.c.b16 %v935, %v931
    %v1268 = vpack.c.b16 %v936, %v932
    %v1269 = vpack.c.b16 %v937, %v933
    %v1270 = vpack.c.b16 %v942, %v938
    %v1271 = vpack.c.b16 %v943, %v939
    %v1272 = vpack.c.b16 %v944, %v940
    %v1273 = vpack.c.b16 %v945, %v941
    %v1274 = vpack.c.b16 %v950, %v946
    %v1275 = vpack.c.b16 %v951, %v947
    %v1276 = vpack.c.b16 %v952, %v948
    %v1277 = vpack.c.b16 %v953, %v949
    %v1278 = vpack.c.b16 %v958, %v954
    %v1279 = vpack.c.b16 %v959, %v955
    %v1280 = vpack.c.b16 %v960, %v956
    %v1281 = vpack.c.b16 %v961, %v957
    %v1282 = vpack.c.b16 %v966, %v962
    %v1283 = vpack.c.b16 %v967, %v963
    %v1284 = vpack.c.b16 %v968, %v964
    %v1285 = vpack.c.b16 %v969, %v965
    %v1286 = vpack.c.b16 %v974, %v970
    %v1287 = vpack.c.b16 %v975, %v971
    %v1288 = vpack.c.b16 %v976, %v972
    %v1289 = vpack.c.b16 %v977, %v973
    %v1290 = vpack.c.b16 %v982, %v978
    %v1291 = vpack.c.b16 %v983, %v979
    %v1292 = vpack.c.b16 %v984, %v980
    %v1293 = vpack.c.b16 %v985, %v981
    %v1294 = vpack.c.b16 %v990, %v986
    %v1295 = vpack.c.b16 %v991, %v987
    %v1296 = vpack.c.b16 %v992, %v988
    %v1297 = vpack.c.b16 %v993, %v989
    %v1298 = vpack.c.b16 %v998, %v994
    %v1299 = vpack.c.b16 %v999, %v995
    %v1300 = vpack.c.b16 %v1000, %v996
    %v1301 = vpack.c.b16 %v1001, %v997
    %v1302 = vpack.c.b16 %v1006, %v1002
    %v1303 = vpack.c.b16 %v1007, %v1003
    %v1304 = vpack.c.b16 %v1008, %v1004
    %v1305 = vpack.c.b16 %v1009, %v1005
    %v1306 = vpack.c.b16 %v1014, %v1010
    %v1307 = vpack.c.b16 %v1015, %v1011
    %v1308 = vpack.c.b16 %v1016, %v1012
    %v1309 = vpack.c.b16 %v1017, %v1013
    %v1310 = vpack.c.b16 %v1022, %v1018
    %v1311 = vpack.c.b16 %v1023, %v1019
    %v1312 = vpack.c.b16 %v1024, %v1020
    %v1313 = vpack.c.b16 %v1025, %v1021
    %v1314 = vpack.c.b16 %v1030, %v1026
    %v1315 = vpack.c.b16 %v1031, %v1027
    %v1316 = vpack.c.b16 %v1032, %v1028
    %v1317 = vpack.c.b16 %v1033, %v1029
    %v1318 = vpack.c.b16 %v1038, %v1034
    %v1319 = vpack.c.b16 %v1039, %v1035
    %v1320 = vpack.c.b16 %v1040, %v1036
    %v1321 = vpack.c.b16 %v1041, %v1037
    %v1322 = vpack.c.b16 %v1046, %v1042
    %v1323 = vpack.c.b16 %v1047, %v1043
    %v1324 = vpack.c.b16 %v1048, %v1044
    %v1325 = vpack.c.b16 %v1049, %v1045
    %v1326 = vpack.c.b16 %v1054, %v1050
    %v1327 = vpack.c.b16 %v1055, %v1051
    %v1328 = vpack.c.b16 %v1056, %v1052
    %v1329 = vpack.c.b16 %v1057, %v1053
    %v1330 = vpack.c.b16 %v1062, %v1058
    %v1331 = vpack.c.b16 %v1063, %v1059
    %v1332 = vpack.c.b16 %v1064, %v1060
    %v1333 = vpack.c.b16 %v1065, %v1061
    %v1334 = vpack.c.b16 %v1070, %v1066
    %v1335 = vpack.c.b16 %v1071, %v1067
    %v1336 = vpack.c.b16 %v1072, %v1068
    %v1337 = vpack.c.b16 %v1073, %v1069
    %v1338 = vpack.c.b16 %v1078, %v1074
    %v1339 = vpack.c.b16 %v1079, %v1075
    %v1340 = vpack.c.b16 %v1080, %v1076
    %v1341 = vpack.c.b16 %v1081, %v1077
    %v1342 = vpack.c.b16 %v1086, %v1082
    %v1343 = vpack.c.b16 %v1087, %v1083
    %v1344 = vpack.c.b16 %v1088, %v1084
    %v1345 = vpack.c.b16 %v1089, %v1085
    %1602 = vmatprep.subr.bf16.mxu0 %v1091
    %1603 = vmatpush1.bf16.msra.mxu0 %v1090
    %1604 = vmatprep.subr.bf16.mxu0 %v1095
    %1605 = vmatpush1.bf16.msra.mxu0 %v1094
    %1606 = vmatprep.subr.bf16.mxu0 %v1099
    %1607 = vmatpush1.bf16.msra.mxu0 %v1098
    %1608 = vmatprep.subr.bf16.mxu0 %v1103
    %1609 = vmatpush1.bf16.msra.mxu0 %v1102
    %1610 = vmatprep.subr.bf16.mxu0 %v1107
    %1611 = vmatpush1.bf16.msra.mxu0 %v1106
    %1612 = vmatprep.subr.bf16.mxu0 %v1111
    %1613 = vmatpush1.bf16.msra.mxu0 %v1110
    %1614 = vmatprep.subr.bf16.mxu0 %v1115
    %1615 = vmatpush1.bf16.msra.mxu0 %v1114
    %1616 = vmatprep.subr.bf16.mxu0 %v1119
    %1617 = vmatpush1.bf16.msra.mxu0 %v1118
    %1618 = vmatprep.subr.bf16.mxu0 %v1123
    %1619 = vmatpush1.bf16.msra.mxu0 %v1122
    %1620 = vmatprep.subr.bf16.mxu0 %v1127
    %1621 = vmatpush1.bf16.msra.mxu0 %v1126
    %1622 = vmatprep.subr.bf16.mxu0 %v1131
    %1623 = vmatpush1.bf16.msra.mxu0 %v1130
    %1624 = vmatprep.subr.bf16.mxu0 %v1135
    %1625 = vmatpush1.bf16.msra.mxu0 %v1134
    %1626 = vmatprep.subr.bf16.mxu0 %v1139
    %1627 = vmatpush1.bf16.msra.mxu0 %v1138
    %1628 = vmatprep.subr.bf16.mxu0 %v1143
    %1629 = vmatpush1.bf16.msra.mxu0 %v1142
    %1630 = vmatprep.subr.bf16.mxu0 %v1147
    %1631 = vmatpush1.bf16.msra.mxu0 %v1146
    %1632 = vmatprep.subr.bf16.mxu0 %v1151
    %1633 = vmatpush1.bf16.msra.mxu0 %v1150
    %1634 = vmatprep.mubr.bf16.mxu0 %v49
    %1635 = vmatmul.mubr.bf16.gmra.mrb[0].mxu0 %v48
    %v1636 = vpop.f32.mrb[0].mxu0
    %v1637 = vadd.f32 0.0, %v1636
    %v1638 = vpop.f32.mrb[0].mxu0
    %v1639 = vadd.f32 0.0, %v1638
    %v1640 = vpop.f32.mrb[0].mxu0
    %v1641 = vpop.f32.mrb[0].mxu0
    %1642 = vdwg.mxu0
    %1643 = vmatprep.subr.bf16.mxu0 %v1155
    %1644 = vmatpush1.bf16.msra.mxu0 %v1154
    %1645 = vmatprep.subr.bf16.mxu0 %v1159
    %1646 = vmatpush1.bf16.msra.mxu0 %v1158
    %1647 = vmatprep.subr.bf16.mxu0 %v1163
    %1648 = vmatpush1.bf16.msra.mxu0 %v1162
    %1649 = vmatprep.subr.bf16.mxu0 %v1167
    %1650 = vmatpush1.bf16.msra.mxu0 %v1166
    %1651 = vmatprep.subr.bf16.mxu0 %v1171
    %1652 = vmatpush1.bf16.msra.mxu0 %v1170
    %1653 = vmatprep.subr.bf16.mxu0 %v1175
    %1654 = vmatpush1.bf16.msra.mxu0 %v1174
    %1655 = vmatprep.subr.bf16.mxu0 %v1179
    %1656 = vmatpush1.bf16.msra.mxu0 %v1178
    %1657 = vmatprep.subr.bf16.mxu0 %v1183
    %1658 = vmatpush1.bf16.msra.mxu0 %v1182
    %1659 = vmatprep.subr.bf16.mxu0 %v1187
    %1660 = vmatpush1.bf16.msra.mxu0 %v1186
    %1661 = vmatprep.subr.bf16.mxu0 %v1191
    %1662 = vmatpush1.bf16.msra.mxu0 %v1190
    %1663 = vmatprep.subr.bf16.mxu0 %v1195
    %1664 = vmatpush1.bf16.msra.mxu0 %v1194
    %1665 = vmatprep.subr.bf16.mxu0 %v1199
    %1666 = vmatpush1.bf16.msra.mxu0 %v1198
    %1667 = vmatprep.subr.bf16.mxu0 %v1203
    %1668 = vmatpush1.bf16.msra.mxu0 %v1202
    %1669 = vmatprep.subr.bf16.mxu0 %v1207
    %1670 = vmatpush1.bf16.msra.mxu0 %v1206
    %1671 = vmatprep.subr.bf16.mxu0 %v1211
    %1672 = vmatpush1.bf16.msra.mxu0 %v1210
    %1673 = vmatprep.subr.bf16.mxu0 %v1215
    %1674 = vmatpush1.bf16.msra.mxu0 %v1214
    %1675 = vmatprep.mubr.bf16.mxu0 %v51
    %1676 = vmatmul.mubr.bf16.gmra.mrb[0].mxu0 %v50
    %v1677 = vpop.f32.mrb[0].mxu0
    %v1678 = vadd.f32 %v1637, %v1677
    %v1679 = vpop.f32.mrb[0].mxu0
    %v1680 = vadd.f32 %v1639, %v1679
    %v1681 = vpop.f32.mrb[0].mxu0
    %v1682 = vpop.f32.mrb[0].mxu0
    %1683 = vdwg.mxu0
    %1684 = vmatprep.subr.bf16.mxu0 %v1219
    %1685 = vmatpush1.bf16.msra.mxu0 %v1218
    %1686 = vmatprep.subr.bf16.mxu0 %v1223
    %1687 = vmatpush1.bf16.msra.mxu0 %v1222
    %1688 = vmatprep.subr.bf16.mxu0 %v1227
    %1689 = vmatpush1.bf16.msra.mxu0 %v1226
    %1690 = vmatprep.subr.bf16.mxu0 %v1231
    %1691 = vmatpush1.bf16.msra.mxu0 %v1230
    %1692 = vmatprep.subr.bf16.mxu0 %v1235
    %1693 = vmatpush1.bf16.msra.mxu0 %v1234
    %1694 = vmatprep.subr.bf16.mxu0 %v1239
    %1695 = vmatpush1.bf16.msra.mxu0 %v1238
    %1696 = vmatprep.subr.bf16.mxu0 %v1243
    %1697 = vmatpush1.bf16.msra.mxu0 %v1242
    %1698 = vmatprep.subr.bf16.mxu0 %v1247
    %1699 = vmatpush1.bf16.msra.mxu0 %v1246
    %1700 = vmatprep.subr.bf16.mxu0 %v1251
    %1701 = vmatpush1.bf16.msra.mxu0 %v1250
    %1702 = vmatprep.subr.bf16.mxu0 %v1255
    %1703 = vmatpush1.bf16.msra.mxu0 %v1254
    %1704 = vmatprep.subr.bf16.mxu0 %v1259
    %1705 = vmatpush1.bf16.msra.mxu0 %v1258
    %1706 = vmatprep.subr.bf16.mxu0 %v1263
    %1707 = vmatpush1.bf16.msra.mxu0 %v1262
    %1708 = vmatprep.subr.bf16.mxu0 %v1267
    %1709 = vmatpush1.bf16.msra.mxu0 %v1266
    %1710 = vmatprep.subr.bf16.mxu0 %v1271
    %1711 = vmatpush1.bf16.msra.mxu0 %v1270
    %1712 = vmatprep.subr.bf16.mxu0 %v1275
    %1713 = vmatpush1.bf16.msra.mxu0 %v1274
    %1714 = vmatprep.subr.bf16.mxu0 %v1279
    %1715 = vmatpush1.bf16.msra.mxu0 %v1278
    %1716 = vmatprep.mubr.bf16.mxu0 %v53
    %1717 = vmatmul.mubr.bf16.gmra.mrb[0].mxu0 %v52
    %v1718 = vpop.f32.mrb[0].mxu0
    %v1719 = vadd.f32 %v1678, %v1718
    %v1720 = vpop.f32.mrb[0].mxu0
    %v1721 = vadd.f32 %v1680, %v1720
    %v1722 = vpop.f32.mrb[0].mxu0
    %v1723 = vpop.f32.mrb[0].mxu0
    %1724 = vdwg.mxu0
    %1725 = vmatprep.subr.bf16.mxu0 %v1283
    %1726 = vmatpush1.bf16.msra.mxu0 %v1282
    %1727 = vmatprep.subr.bf16.mxu0 %v1287
    %1728 = vmatpush1.bf16.msra.mxu0 %v1286
    %1729 = vmatprep.subr.bf16.mxu0 %v1291
    %1730 = vmatpush1.bf16.msra.mxu0 %v1290
    %1731 = vmatprep.subr.bf16.mxu0 %v1295
    %1732 = vmatpush1.bf16.msra.mxu0 %v1294
    %1733 = vmatprep.subr.bf16.mxu0 %v1299
    %1734 = vmatpush1.bf16.msra.mxu0 %v1298
    %1735 = vmatprep.subr.bf16.mxu0 %v1303
    %1736 = vmatpush1.bf16.msra.mxu0 %v1302
    %1737 = vmatprep.subr.bf16.mxu0 %v1307
    %1738 = vmatpush1.bf16.msra.mxu0 %v1306
    %1739 = vmatprep.subr.bf16.mxu0 %v1311
    %1740 = vmatpush1.bf16.msra.mxu0 %v1310
    %1741 = vmatprep.subr.bf16.mxu0 %v1315
    %1742 = vmatpush1.bf16.msra.mxu0 %v1314
    %1743 = vmatprep.subr.bf16.mxu0 %v1319
    %1744 = vmatpush1.bf16.msra.mxu0 %v1318
    %1745 = vmatprep.subr.bf16.mxu0 %v1323
    %1746 = vmatpush1.bf16.msra.mxu0 %v1322
    %1747 = vmatprep.subr.bf16.mxu0 %v1327
    %1748 = vmatpush1.bf16.msra.mxu0 %v1326
    %1749 = vmatprep.subr.bf16.mxu0 %v1331
    %1750 = vmatpush1.bf16.msra.mxu0 %v1330
    %1751 = vmatprep.subr.bf16.mxu0 %v1335
    %1752 = vmatpush1.bf16.msra.mxu0 %v1334
    %1753 = vmatprep.subr.bf16.mxu0 %v1339
    %1754 = vmatpush1.bf16.msra.mxu0 %v1338
    %1755 = vmatprep.subr.bf16.mxu0 %v1343
    %1756 = vmatpush1.bf16.msra.mxu0 %v1342
    %1757 = vmatprep.mubr.bf16.mxu0 %v55
    %1758 = vmatmul.mubr.bf16.gmra.mrb[0].mxu0 %v54
    %v1759 = vpop.f32.mrb[0].mxu0
    %v1760 = vadd.f32 %v1719, %v1759
    %v1761 = vpop.f32.mrb[0].mxu0
    %v1762 = vadd.f32 %v1721, %v1761
    %v1763 = vpop.f32.mrb[0].mxu0
    %v1764 = vpop.f32.mrb[0].mxu0
    %1765 = vdwg.mxu0
    %1766 = vmatprep.subr.bf16.mxu0 %v1093
    %1767 = vmatpush1.bf16.msra.mxu0 %v1092
    %1768 = vmatprep.subr.bf16.mxu0 %v1097
    %1769 = vmatpush1.bf16.msra.mxu0 %v1096
    %1770 = vmatprep.subr.bf16.mxu0 %v1101
    %1771 = vmatpush1.bf16.msra.mxu0 %v1100
    %1772 = vmatprep.subr.bf16.mxu0 %v1105
    %1773 = vmatpush1.bf16.msra.mxu0 %v1104
    %1774 = vmatprep.subr.bf16.mxu0 %v1109
    %1775 = vmatpush1.bf16.msra.mxu0 %v1108
    %1776 = vmatprep.subr.bf16.mxu0 %v1113
    %1777 = vmatpush1.bf16.msra.mxu0 %v1112
    %1778 = vmatprep.subr.bf16.mxu0 %v1117
    %1779 = vmatpush1.bf16.msra.mxu0 %v1116
    %1780 = vmatprep.subr.bf16.mxu0 %v1121
    %1781 = vmatpush1.bf16.msra.mxu0 %v1120
    %1782 = vmatprep.subr.bf16.mxu0 %v1125
    %1783 = vmatpush1.bf16.msra.mxu0 %v1124
    %1784 = vmatprep.subr.bf16.mxu0 %v1129
    %1785 = vmatpush1.bf16.msra.mxu0 %v1128
    %1786 = vmatprep.subr.bf16.mxu0 %v1133
    %1787 = vmatpush1.bf16.msra.mxu0 %v1132
    %1788 = vmatprep.subr.bf16.mxu0 %v1137
    %1789 = vmatpush1.bf16.msra.mxu0 %v1136
    %1790 = vmatprep.subr.bf16.mxu0 %v1141
    %1791 = vmatpush1.bf16.msra.mxu0 %v1140
    %1792 = vmatprep.subr.bf16.mxu0 %v1145
    %1793 = vmatpush1.bf16.msra.mxu0 %v1144
    %1794 = vmatprep.subr.bf16.mxu0 %v1149
    %1795 = vmatpush1.bf16.msra.mxu0 %v1148
    %1796 = vmatprep.subr.bf16.mxu0 %v1153
    %1797 = vmatpush1.bf16.msra.mxu0 %v1152
    %1798 = vmatprep.mubr.bf16.mxu0 %v49
    %1799 = vmatmul.mubr.bf16.gmra.mrb[0].mxu0 %v48
    %v1800 = vpop.f32.mrb[0].mxu0
    %v1801 = vadd.f32 0.0, %v1800
    %v1802 = vpop.f32.mrb[0].mxu0
    %v1803 = vadd.f32 0.0, %v1802
    %v1804 = vpop.f32.mrb[0].mxu0
    %v1805 = vpop.f32.mrb[0].mxu0
    %1806 = vdwg.mxu0
    %1807 = vmatprep.subr.bf16.mxu0 %v1157
    %1808 = vmatpush1.bf16.msra.mxu0 %v1156
    %1809 = vmatprep.subr.bf16.mxu0 %v1161
    %1810 = vmatpush1.bf16.msra.mxu0 %v1160
    %1811 = vmatprep.subr.bf16.mxu0 %v1165
    %1812 = vmatpush1.bf16.msra.mxu0 %v1164
    %1813 = vmatprep.subr.bf16.mxu0 %v1169
    %1814 = vmatpush1.bf16.msra.mxu0 %v1168
    %1815 = vmatprep.subr.bf16.mxu0 %v1173
    %1816 = vmatpush1.bf16.msra.mxu0 %v1172
    %1817 = vmatprep.subr.bf16.mxu0 %v1177
    %1818 = vmatpush1.bf16.msra.mxu0 %v1176
    %1819 = vmatprep.subr.bf16.mxu0 %v1181
    %1820 = vmatpush1.bf16.msra.mxu0 %v1180
    %1821 = vmatprep.subr.bf16.mxu0 %v1185
    %1822 = vmatpush1.bf16.msra.mxu0 %v1184
    %1823 = vmatprep.subr.bf16.mxu0 %v1189
    %1824 = vmatpush1.bf16.msra.mxu0 %v1188
    %1825 = vmatprep.subr.bf16.mxu0 %v1193
    %1826 = vmatpush1.bf16.msra.mxu0 %v1192
    %1827 = vmatprep.subr.bf16.mxu0 %v1197
    %1828 = vmatpush1.bf16.msra.mxu0 %v1196
    %1829 = vmatprep.subr.bf16.mxu0 %v1201
    %1830 = vmatpush1.bf16.msra.mxu0 %v1200
    %1831 = vmatprep.subr.bf16.mxu0 %v1205
    %1832 = vmatpush1.bf16.msra.mxu0 %v1204
    %1833 = vmatprep.subr.bf16.mxu0 %v1209
    %1834 = vmatpush1.bf16.msra.mxu0 %v1208
    %1835 = vmatprep.subr.bf16.mxu0 %v1213
    %1836 = vmatpush1.bf16.msra.mxu0 %v1212
    %1837 = vmatprep.subr.bf16.mxu0 %v1217
    %1838 = vmatpush1.bf16.msra.mxu0 %v1216
    %1839 = vmatprep.mubr.bf16.mxu0 %v51
    %1840 = vmatmul.mubr.bf16.gmra.mrb[0].mxu0 %v50
    %v1841 = vpop.f32.mrb[0].mxu0
    %v1842 = vadd.f32 %v1801, %v1841
    %v1843 = vpop.f32.mrb[0].mxu0
    %v1844 = vadd.f32 %v1803, %v1843
    %v1845 = vpop.f32.mrb[0].mxu0
    %v1846 = vpop.f32.mrb[0].mxu0
    %1847 = vdwg.mxu0
    %1848 = vmatprep.subr.bf16.mxu0 %v1221
    %1849 = vmatpush1.bf16.msra.mxu0 %v1220
    %1850 = vmatprep.subr.bf16.mxu0 %v1225
    %1851 = vmatpush1.bf16.msra.mxu0 %v1224
    %1852 = vmatprep.subr.bf16.mxu0 %v1229
    %1853 = vmatpush1.bf16.msra.mxu0 %v1228
    %1854 = vmatprep.subr.bf16.mxu0 %v1233
    %1855 = vmatpush1.bf16.msra.mxu0 %v1232
    %1856 = vmatprep.subr.bf16.mxu0 %v1237
    %1857 = vmatpush1.bf16.msra.mxu0 %v1236
    %1858 = vmatprep.subr.bf16.mxu0 %v1241
    %1859 = vmatpush1.bf16.msra.mxu0 %v1240
    %1860 = vmatprep.subr.bf16.mxu0 %v1245
    %1861 = vmatpush1.bf16.msra.mxu0 %v1244
    %1862 = vmatprep.subr.bf16.mxu0 %v1249
    %1863 = vmatpush1.bf16.msra.mxu0 %v1248
    %1864 = vmatprep.subr.bf16.mxu0 %v1253
    %1865 = vmatpush1.bf16.msra.mxu0 %v1252
    %1866 = vmatprep.subr.bf16.mxu0 %v1257
    %1867 = vmatpush1.bf16.msra.mxu0 %v1256
    %1868 = vmatprep.subr.bf16.mxu0 %v1261
    %1869 = vmatpush1.bf16.msra.mxu0 %v1260
    %1870 = vmatprep.subr.bf16.mxu0 %v1265
    %1871 = vmatpush1.bf16.msra.mxu0 %v1264
    %1872 = vmatprep.subr.bf16.mxu0 %v1269
    %1873 = vmatpush1.bf16.msra.mxu0 %v1268
    %1874 = vmatprep.subr.bf16.mxu0 %v1273
    %1875 = vmatpush1.bf16.msra.mxu0 %v1272
    %1876 = vmatprep.subr.bf16.mxu0 %v1277
    %1877 = vmatpush1.bf16.msra.mxu0 %v1276
    %1878 = vmatprep.subr.bf16.mxu0 %v1281
    %1879 = vmatpush1.bf16.msra.mxu0 %v1280
    %1880 = vmatprep.mubr.bf16.mxu0 %v53
    %1881 = vmatmul.mubr.bf16.gmra.mrb[0].mxu0 %v52
    %v1882 = vpop.f32.mrb[0].mxu0
    %v1883 = vadd.f32 %v1842, %v1882
    %v1884 = vpop.f32.mrb[0].mxu0
    %v1885 = vadd.f32 %v1844, %v1884
    %v1886 = vpop.f32.mrb[0].mxu0
    %v1887 = vpop.f32.mrb[0].mxu0
    %1888 = vdwg.mxu0
    %1889 = vmatprep.subr.bf16.mxu0 %v1285
    %1890 = vmatpush1.bf16.msra.mxu0 %v1284
    %1891 = vmatprep.subr.bf16.mxu0 %v1289
    %1892 = vmatpush1.bf16.msra.mxu0 %v1288
    %1893 = vmatprep.subr.bf16.mxu0 %v1293
    %1894 = vmatpush1.bf16.msra.mxu0 %v1292
    %1895 = vmatprep.subr.bf16.mxu0 %v1297
    %1896 = vmatpush1.bf16.msra.mxu0 %v1296
    %1897 = vmatprep.subr.bf16.mxu0 %v1301
    %1898 = vmatpush1.bf16.msra.mxu0 %v1300
    %1899 = vmatprep.subr.bf16.mxu0 %v1305
    %1900 = vmatpush1.bf16.msra.mxu0 %v1304
    %1901 = vmatprep.subr.bf16.mxu0 %v1309
    %1902 = vmatpush1.bf16.msra.mxu0 %v1308
    %1903 = vmatprep.subr.bf16.mxu0 %v1313
    %1904 = vmatpush1.bf16.msra.mxu0 %v1312
    %1905 = vmatprep.subr.bf16.mxu0 %v1317
    %1906 = vmatpush1.bf16.msra.mxu0 %v1316
    %1907 = vmatprep.subr.bf16.mxu0 %v1321
    %1908 = vmatpush1.bf16.msra.mxu0 %v1320
    %1909 = vmatprep.subr.bf16.mxu0 %v1325
    %1910 = vmatpush1.bf16.msra.mxu0 %v1324
    %1911 = vmatprep.subr.bf16.mxu0 %v1329
    %1912 = vmatpush1.bf16.msra.mxu0 %v1328
    %1913 = vmatprep.subr.bf16.mxu0 %v1333
    %1914 = vmatpush1.bf16.msra.mxu0 %v1332
    %1915 = vmatprep.subr.bf16.mxu0 %v1337
    %1916 = vmatpush1.bf16.msra.mxu0 %v1336
    %1917 = vmatprep.subr.bf16.mxu0 %v1341
    %1918 = vmatpush1.bf16.msra.mxu0 %v1340
    %1919 = vmatprep.subr.bf16.mxu0 %v1345
    %1920 = vmatpush1.bf16.msra.mxu0 %v1344
    %1921 = vmatprep.mubr.bf16.mxu0 %v55
    %1922 = vmatmul.mubr.bf16.gmra.mrb[0].mxu0 %v54
    %v1923 = vpop.f32.mrb[0].mxu0
    %v1924 = vadd.f32 %v1883, %v1923
    %v1925 = vpop.f32.mrb[0].mxu0
    %v1926 = vadd.f32 %v1885, %v1925
    %v1927 = vpop.f32.mrb[0].mxu0
    %v1928 = vpop.f32.mrb[0].mxu0
    %1929 = vdwg.mxu0
    %v1930 = vadd.f32 %v318, %v1760
    %v1931 = vadd.f32 %v319, %v1762
    %v1932 = vadd.f32 %v320, %v1924
    %v1933 = vadd.f32 %v321, %v1926
    %1934 = vst [vmem:[#allocation2] sm:$0xff] %v1930
    %1935 = vst [vmem:[#allocation2 + $0x8] sm:$0xff] %v1931
    %1936 = vst [vmem:[#allocation2 + $0x10] sm:$0xff] %v1932
    %1937 = vst [vmem:[#allocation2 + $0x18] sm:$0xff] %v1933
    // Predicated region
    $region26: #{finetune_forward.1} parent=1 // pred_check
      %p1938 = pneg %p32
    $region27: #{finetune_forward.1} parent=1 // pred_check_branch
      %1940 = sbr.rel (%p1938) target = $region29
    $region28: #{finetune_forward.1} parent=1 // pred_region
      %v1941 = vld [vmem:[#allocation2] sm:$0xff]
      %v1942 = vld [vmem:[#allocation2 + $0x8] sm:$0xff]
      %v1943 = vld [vmem:[#allocation2 + $0x10] sm:$0xff]
      %v1944 = vld [vmem:[#allocation2 + $0x18] sm:$0xff]
      %v1945 = vld [vmem:[%s2] ss:$2 sm:$0xf]
      %v1947 = vlaneseq
      %v1948 = vshrl.u32 %v1947, 7
      %v1949 = vsub.s32 0, %v1948
      %v1950 = vrot.slane %v1945, %v1949
      %v1951 = vlaneseq
      %v1952 = vshrl.u32 %v1951, 7
      %v1953 = vsub.s32 1, %v1952
      %v1954 = vrot.slane %v1945, %v1953
      %v1955 = vlaneseq
      %v1956 = vshrl.u32 %v1955, 7
      %v1957 = vsub.s32 2, %v1956
      %v1958 = vrot.slane %v1945, %v1957
      %v1959 = vlaneseq
      %v1960 = vshrl.u32 %v1959, 7
      %v1961 = vsub.s32 3, %v1960
      %v1962 = vrot.slane %v1945, %v1961
      %v1967 = vadd.f32 %v1941, %v1950
      %v1968 = vadd.f32 %v1942, %v1954
      %v1969 = vadd.f32 %v1943, %v1958
      %v1970 = vadd.f32 %v1944, %v1962
      %v1971 = vmax.f32 %v1967, 0.0
      %v1972 = vmax.f32 %v1968, 0.0
      %v1973 = vmax.f32 %v1969, 0.0
      %v1974 = vmax.f32 %v1970, 0.0
      %s1975 = scalar_lea.vmem %s2, 1
      %v1976 = vld [vmem:[%s1975] ss:$2 sm:$0xf]
      %v1978 = vlaneseq
      %v1979 = vshrl.u32 %v1978, 7
      %v1980 = vsub.s32 0, %v1979
      %v1981 = vrot.slane %v1976, %v1980
      %v1982 = vlaneseq
      %v1983 = vshrl.u32 %v1982, 7
      %v1984 = vsub.s32 1, %v1983
      %v1985 = vrot.slane %v1976, %v1984
      %v1986 = vlaneseq
      %v1987 = vshrl.u32 %v1986, 7
      %v1988 = vsub.s32 2, %v1987
      %v1989 = vrot.slane %v1976, %v1988
      %v1990 = vlaneseq
      %v1991 = vshrl.u32 %v1990, 7
      %v1992 = vsub.s32 3, %v1991
      %v1993 = vrot.slane %v1976, %v1992
      %v1998 = vmul.f32 %v1971, %v1981
      %v1999 = vmul.f32 %v1972, %v1985
      %v2000 = vmul.f32 %v1973, %v1989
      %v2001 = vmul.f32 %v1974, %v1993
      %v2002 = vadd.f32 %v1998, %v1999
      %v2003 = vadd.f32 %v2002, %v2000
      %v2004 = vadd.f32 %v2003, %v2001
      %2005 = vadd.xlane.f32.xlu0 %v2004
      %v2006 = vpop.xlane.xlu0 %2005
      %s2007 = sld [smem:[#allocation3]]
      %v2008 = vstv %s2007
      %v2009 = vadd.f32 %v2006, %v2008
      %v2010 = vsub.f32 0.0, %v2009
      %v2011 = vmul.f32 %v2010, 1.442695
      %v2012 = vpow.pop %v2011
      %v2013 = vadd.f32 %v2012, 1.0
      %v2014 = vrcp.pop %v2013
      %v2015 = vmul.f32 1.0, %v2014
      %vm2016 = vcmask 7168
      %2017 = vst.msk [vmem:[%s4] sm:$0xff] %vm2016, %v2015
    $region29: #{finetune_forward.1} parent=1 // pred_fallthru
      _
    // Predicated region
    $region30: #{finetune_forward.1} parent=1 // pred_check
      _
    $region31: #{finetune_forward.1} parent=1 // pred_check_branch
      %2019 = sbr.rel (0) target = $region33
    $region32: #{finetune_forward.1} parent=1 // pred_region
      _
    $region33: #{finetune_forward.1} parent=1 // pred_fallthru
      _
    // Predicated region
    $region34: #{finetune_forward.1} parent=1 // pred_check
      _
    $region35: #{finetune_forward.1} parent=1 // pred_check_branch
      %2021 = sbr.rel (0) target = $region37
    $region36: #{finetune_forward.1} parent=1 // pred_region
      _
    $region37: #{finetune_forward.1} parent=1 // pred_fallthru
      _
    %2022 = vsyncpa [#allocation5], 1

</llo_original>
